<compile_context>
chip_gen: v7x
topology: tpu7x:2x2x1
jax: 0.10.0
libtpu: 0.0.40
codegen_flags: <defaults>
</compile_context>

<pallas_src>
import jax
import jax.numpy as jnp
from jax.experimental import pallas as pl
from jax.experimental.pallas import tpu as pltpu

INP = 32
D_IN = INP * INP          # 1024 flattened features
HIDDEN = 512
LATENT = 100
NUM_CLASSES = 10

LANE = 128
SUBLANE = 8
LATENT_P = 128            # LATENT padded to lane width (zero-filled)
OUT_P = 128               # NUM_CLASSES padded to lane width (zero-filled)

_TB_CANDIDATES = (512, 256, 128, 64, 32, 16, 8)
_STEP_OVERHEAD_ROWS = 16  # ~0.35us per grid step, expressed in "row equivalents"


def _round_up(x, m):
    return (x + m - 1) // m * m


def _select_batch_tile(B):
    """Padding-aware batch-tile selection (static, B is a trace-time shape).

    Priorities:
      * minimize padded rows pushed through the three matmuls and output stores,
      * keep >= 2 grid steps when B allows it, so v7x's two TensorCores both
        get batch tiles via the "parallel" grid axis,
      * otherwise prefer the largest tile (fewer grid steps => less per-step
        pipeline overhead).
    """
    B = max(int(B), 1)
    if B <= SUBLANE:
        return SUBLANE
    best_tb, best_score = SUBLANE, None
    for tb in _TB_CANDIDATES:
        bp = _round_up(B, tb)
        steps = bp // tb
        waste = bp - B                                  # dead rows of MXU work
        single_core_penalty = bp if steps < 2 else 0    # one v7x TC would idle
        score = waste + single_core_penalty + steps * _STEP_OVERHEAD_ROWS
        if best_score is None or score < best_score:
            best_score, best_tb = score, tb
    return best_tb


def two_layer_net_kernel(x_ref, w1_ref, b1_ref, w2_ref, b2_ref, w3_ref, b3_ref,
                         emb_ref, out_ref):
    """Fused Linear -> ReLU -> Linear -> Sigmoid -> Linear on one batch tile."""
    x = x_ref[...]                                                      # (TB, 1024)

    h = jnp.dot(x, w1_ref[...], preferred_element_type=jnp.float32)     # (TB, 512)
    h = jnp.maximum(h + b1_ref[...], 0.0)                               # ReLU

    z = jnp.dot(h, w2_ref[...], preferred_element_type=jnp.float32)     # (TB, 128)
    z = z + b2_ref[...]

    emb = 1.0 / (1.0 + jnp.exp(-z))                                     # exact sigmoid
    emb_ref[...] = emb.astype(emb_ref.dtype)

    # Rows LATENT..127 of w3 are zero, so padded sigmoid lanes don't leak into out.
    o = jnp.dot(emb, w3_ref[...], preferred_element_type=jnp.float32)   # (TB, 128)
    out_ref[...] = (o + b3_ref[...]).astype(out_ref.dtype)


def prepare_params(params):
    """One-time weight padding / layout (hoisted out of the per-call forward).

    Returns f32, lane-dense padded weights:
      w1 (1024,512), b1 (1,512), w2p (512,128), b2p (1,128),
      w3p (128,128), b3p (1,128).
    Zero-padded w3 rows guarantee the sigmoid(0)=0.5 values in the padded
    embedding lanes contribute nothing to the classifier output.
    """
    w1, b1, w2, b2, w3, b3 = params
    w1f = w1.astype(jnp.float32)
    b1r = b1.reshape(1, HIDDEN).astype(jnp.float32)
    w2p = jnp.zeros((HIDDEN, LATENT_P), jnp.float32).at[:, :LATENT].set(w2)
    b2p = jnp.zeros((1, LATENT_P), jnp.float32).at[0, :LATENT].set(b2)
    w3p = jnp.zeros((LATENT_P, OUT_P), jnp.float32).at[:LATENT, :NUM_CLASSES].set(w3)
    b3p = jnp.zeros((1, OUT_P), jnp.float32).at[0, :NUM_CLASSES].set(b3)
    return (w1f, b1r, w2p, b2p, w3p, b3p)


def two_layer_net_forward(x, prepared_params):
    """x: (B, 32, 32) float32. prepared_params: output of prepare_params().

    Returns (embeddings (B,100), out (B,10)).
    """
    w1, b1r, w2p, b2p, w3p, b3p = prepared_params
    B = x.shape[0]
    x2d = x.reshape(B, -1).astype(jnp.float32)        # nn.Flatten (row-major)

    TB = _select_batch_tile(B)
    Bp = _round_up(B, TB)
    if Bp != B:
        x2d = jnp.pad(x2d, ((0, Bp - B), (0, 0)))

    grid = (Bp // TB,)

    def batch_spec(shape):                        # activation tiles, pipelined
        return pl.BlockSpec(shape, lambda i: (i, 0))

    def const_spec(shape):                        # weights resident across grid steps
        return pl.BlockSpec(shape, lambda i: (0, 0))

    flops = 2 * Bp * (D_IN * HIDDEN + HIDDEN * LATENT_P + LATENT_P * OUT_P)
    bytes_accessed = 4 * (Bp * (D_IN + LATENT_P + OUT_P)
                          + D_IN * HIDDEN + HIDDEN * LATENT_P + LATENT_P * OUT_P
                          + HIDDEN + LATENT_P + OUT_P)

    emb_p, out_p = pl.pallas_call(
        two_layer_net_kernel,
        out_shape=(
            jax.ShapeDtypeStruct((Bp, LATENT_P), jnp.float32),
            jax.ShapeDtypeStruct((Bp, OUT_P), jnp.float32),
        ),
        grid=grid,
        in_specs=[
            batch_spec((TB, D_IN)),               # x tile (double-buffered by Pallas)
            const_spec((D_IN, HIDDEN)),
            const_spec((1, HIDDEN)),
            const_spec((HIDDEN, LATENT_P)),
            const_spec((1, LATENT_P)),
            const_spec((LATENT_P, OUT_P)),
            const_spec((1, OUT_P)),
        ],
        out_specs=(
            batch_spec((TB, LATENT_P)),
            batch_spec((TB, OUT_P)),
        ),
        compiler_params=pltpu.CompilerParams(
            # Batch tiles are independent -> shard across v7x's two TensorCores.
            # (If a v7x profile shows a single-core run, pltpu.CORE_PARALLEL is
            #  the next lever.)
            dimension_semantics=("parallel",),
            vmem_limit_bytes=32 * 1024 * 1024,    # explicit; ~10 MiB used at TB=512
        ),
        cost_estimate=pl.CostEstimate(
            flops=flops,
            transcendentals=Bp * LATENT_P,
            bytes_accessed=bytes_accessed,
        ),
    )(x2d, w1, b1r, w2p, b2p, w3p, b3p)

    # Slice off batch padding only when it exists; the column slice (lane
    # padding -> logical width) is required to match the module's output shapes.
    if Bp != B:
        emb_p = emb_p[:B]
        out_p = out_p[:B]
    return emb_p[:, :LATENT], out_p[:, :NUM_CLASSES]


def init_params(key):
    """Deterministic init matching the nn.Linear shapes (stored as (in, out))."""
    k1, k2, k3, k4, k5, k6 = jax.random.split(key, 6)

    def uni(k, shape, fan_in):
        bound = 1.0 / jnp.sqrt(fan_in)
        return jax.random.uniform(k, shape, jnp.float32, -bound, bound)

    w1 = uni(k1, (D_IN, HIDDEN), D_IN)            # Linear(1024, 512)
    b1 = uni(k2, (HIDDEN,), D_IN)
    w2 = uni(k3, (HIDDEN, LATENT), HIDDEN)        # Linear(512, 100)
    b2 = uni(k4, (LATENT,), HIDDEN)
    w3 = uni(k5, (LATENT, NUM_CLASSES), LATENT)   # Linear(100, 10) classifier
    b3 = uni(k6, (NUM_CLASSES,), LATENT)
    return (w1, b1, w2, b2, w3, b3)


def reference_forward(x, params):
    """Pure-JAX reference mirroring the PyTorch module."""
    w1, b1, w2, b2, w3, b3 = params
    xf = x.reshape(x.shape[0], -1)
    h = jnp.maximum(xf @ w1 + b1, 0.0)
    emb = jax.nn.sigmoid(h @ w2 + b2)
    out = emb @ w3 + b3
    return emb, out


if __name__ == "__main__":
    key = jax.random.PRNGKey(0)
    kx, kp = jax.random.split(key)

    params = init_params(kp)
    prepared = jax.block_until_ready(prepare_params(params))   # padded once, reused

    fwd = jax.jit(two_layer_net_forward)

    # Small-batch path (single minimal tile).
    B = 2
    x = jax.random.normal(kx, (B, INP, INP), dtype=jnp.float32)
    emb, out = fwd(x, prepared)
    jax.block_until_ready((emb, out))

    emb_ref, out_ref = reference_forward(x, params)
    assert emb.shape == (B, LATENT) and out.shape == (B, NUM_CLASSES)
    assert jnp.allclose(emb, emb_ref, atol=1e-5, rtol=1e-5)
    assert jnp.allclose(out, out_ref, atol=1e-4, rtol=1e-4)

    # Multi-tile path with batch padding (exercises the grid + padded rows).
    B2 = 48
    x2 = jax.random.normal(jax.random.PRNGKey(1), (B2, INP, INP), dtype=jnp.float32)
    emb2, out2 = fwd(x2, prepared)
    jax.block_until_ready((emb2, out2))
    emb2_ref, out2_ref = reference_forward(x2, params)
    assert emb2.shape == (B2, LATENT) and out2.shape == (B2, NUM_CLASSES)
    assert jnp.allclose(emb2, emb2_ref, atol=1e-5, rtol=1e-5)
    assert jnp.allclose(out2, out2_ref, atol=1e-4, rtol=1e-4)

    print("KERNEL_OK")
</pallas_src>

<mosaic_0001>
module attributes {stable_mosaic.version = 11 : i64} {
  func.func @two_layer_net_kernel(%arg0: i32, %arg1: memref<8x1024xf32, #tpu.memory_space<vmem>>, %arg2: memref<1024x512xf32, #tpu.memory_space<vmem>>, %arg3: memref<1x512xf32, #tpu.memory_space<vmem>>, %arg4: memref<512x128xf32, #tpu.memory_space<vmem>>, %arg5: memref<1x128xf32, #tpu.memory_space<vmem>>, %arg6: memref<128x128xf32, #tpu.memory_space<vmem>>, %arg7: memref<1x128xf32, #tpu.memory_space<vmem>>, %arg8: memref<8x128xf32, #tpu.memory_space<vmem>>, %arg9: memref<8x128xf32, #tpu.memory_space<vmem>>) attributes {dimension_semantics = [#tpu.dimension_semantics<parallel>], iteration_bounds = array<i64: 1>, scalar_prefetch = 0 : i64, scratch_operands = 0 : i64, tpu.core_type = #tpu.core_type<tc>, window_params = [{transform_indices = @transform_0, window_bounds = array<i64: 8, 1024>}, {pipeline_mode = #tpu.pipeline_mode<synchronous>, transform_indices = @transform_1, window_bounds = array<i64: 1024, 512>}, {pipeline_mode = #tpu.pipeline_mode<synchronous>, transform_indices = @transform_2, window_bounds = array<i64: 1, 512>}, {pipeline_mode = #tpu.pipeline_mode<synchronous>, transform_indices = @transform_3, window_bounds = array<i64: 512, 128>}, {pipeline_mode = #tpu.pipeline_mode<synchronous>, transform_indices = @transform_4, window_bounds = array<i64: 1, 128>}, {pipeline_mode = #tpu.pipeline_mode<synchronous>, transform_indices = @transform_5, window_bounds = array<i64: 128, 128>}, {pipeline_mode = #tpu.pipeline_mode<synchronous>, transform_indices = @transform_6, window_bounds = array<i64: 1, 128>}, {transform_indices = @transform_7, window_bounds = array<i64: 8, 128>}, {transform_indices = @transform_8, window_bounds = array<i64: 8, 128>}]} {
    %c0 = arith.constant 0 : index
    %c0_0 = arith.constant 0 : index
    %0 = vector.load %arg1[%c0, %c0_0] : memref<8x1024xf32, #tpu.memory_space<vmem>>, vector<8x1024xf32>
    %c0_1 = arith.constant 0 : index
    %c0_2 = arith.constant 0 : index
    %1 = vector.load %arg2[%c0_1, %c0_2] : memref<1024x512xf32, #tpu.memory_space<vmem>>, vector<1024x512xf32>
    %cst = arith.constant dense<0.000000e+00> : vector<8x512xf32>
    %2 = tpu.matmul %0, %1, %cst {dimension_numbers = #tpu.dot_dimension_numbers<[1], [0], [0], [1], [0, 0, 1, 1], [], []>} : vector<8x1024xf32>, vector<1024x512xf32>, vector<8x512xf32> -> vector<8x512xf32>
    %c0_3 = arith.constant 0 : index
    %c0_4 = arith.constant 0 : index
    %3 = vector.load %arg3[%c0_3, %c0_4] : memref<1x512xf32, #tpu.memory_space<vmem>>, vector<1x512xf32>
    %4 = vector.broadcast %3 : vector<1x512xf32> to vector<8x512xf32>
    %5 = arith.addf %2, %4 : vector<8x512xf32>
    %cst_5 = arith.constant 0.000000e+00 : f32
    %6 = vector.broadcast %cst_5 : f32 to vector<8x512xf32>
    %7 = arith.maximumf %5, %6 : vector<8x512xf32>
    %c0_6 = arith.constant 0 : index
    %c0_7 = arith.constant 0 : index
    %8 = vector.load %arg4[%c0_6, %c0_7] : memref<512x128xf32, #tpu.memory_space<vmem>>, vector<512x128xf32>
    %cst_8 = arith.constant dense<0.000000e+00> : vector<8x128xf32>
    %9 = tpu.matmul %7, %8, %cst_8 {dimension_numbers = #tpu.dot_dimension_numbers<[1], [0], [0], [1], [0, 0, 1, 1], [], []>} : vector<8x512xf32>, vector<512x128xf32>, vector<8x128xf32> -> vector<8x128xf32>
    %c0_9 = arith.constant 0 : index
    %c0_10 = arith.constant 0 : index
    %10 = vector.load %arg5[%c0_9, %c0_10] : memref<1x128xf32, #tpu.memory_space<vmem>>, vector<1x128xf32>
    %11 = vector.broadcast %10 : vector<1x128xf32> to vector<8x128xf32>
    %12 = arith.addf %9, %11 : vector<8x128xf32>
    %cst_11 = arith.constant 0.000000e+00 : f32
    %13 = vector.broadcast %cst_11 : f32 to vector<8x128xf32>
    %14 = arith.subf %13, %12 : vector<8x128xf32>
    %15 = math.exp %14 : vector<8x128xf32>
    %cst_12 = arith.constant 1.000000e+00 : f32
    %16 = vector.broadcast %cst_12 : f32 to vector<8x128xf32>
    %17 = arith.addf %16, %15 : vector<8x128xf32>
    %cst_13 = arith.constant 1.000000e+00 : f32
    %18 = vector.broadcast %cst_13 : f32 to vector<8x128xf32>
    %19 = arith.divf %18, %17 : vector<8x128xf32>
    %c0_14 = arith.constant 0 : index
    %c0_15 = arith.constant 0 : index
    %20 = vector.load %arg8[%c0_14, %c0_15] : memref<8x128xf32, #tpu.memory_space<vmem>>, vector<8x128xf32>
    tpu.vector_store %arg8[%c0_14, %c0_15], %19 {strides = array<i32>} : memref<8x128xf32, #tpu.memory_space<vmem>>, vector<8x128xf32>,
    %c0_16 = arith.constant 0 : index
    %c0_17 = arith.constant 0 : index
    %21 = vector.load %arg6[%c0_16, %c0_17] : memref<128x128xf32, #tpu.memory_space<vmem>>, vector<128x128xf32>
    %cst_18 = arith.constant dense<0.000000e+00> : vector<8x128xf32>
    %22 = tpu.matmul %19, %21, %cst_18 {dimension_numbers = #tpu.dot_dimension_numbers<[1], [0], [0], [1], [0, 0, 1, 1], [], []>} : vector<8x128xf32>, vector<128x128xf32>, vector<8x128xf32> -> vector<8x128xf32>
    %c0_19 = arith.constant 0 : index
    %c0_20 = arith.constant 0 : index
    %23 = vector.load %arg7[%c0_19, %c0_20] : memref<1x128xf32, #tpu.memory_space<vmem>>, vector<1x128xf32>
    %24 = vector.broadcast %23 : vector<1x128xf32> to vector<8x128xf32>
    %25 = arith.addf %22, %24 : vector<8x128xf32>
    %c0_21 = arith.constant 0 : index
    %c0_22 = arith.constant 0 : index
    %26 = vector.load %arg9[%c0_21, %c0_22] : memref<8x128xf32, #tpu.memory_space<vmem>>, vector<8x128xf32>
    tpu.vector_store %arg9[%c0_21, %c0_22], %25 {strides = array<i32>} : memref<8x128xf32, #tpu.memory_space<vmem>>, vector<8x128xf32>,
    return
  }
  func.func @transform_0(%arg0: i32) -> (i32, i32) {
    %c0_i32 = arith.constant 0 : i32
    %c0_i32_0 = arith.constant 0 : i32
    return %arg0, %c0_i32 : i32, i32
  }
  func.func @transform_1(%arg0: i32) -> (i32, i32) {
    %c0_i32 = arith.constant 0 : i32
    %c0_i32_0 = arith.constant 0 : i32
    %c0_i32_1 = arith.constant 0 : i32
    return %c0_i32, %c0_i32_0 : i32, i32
  }
  func.func @transform_2(%arg0: i32) -> (i32, i32) {
    %c0_i32 = arith.constant 0 : i32
    %c0_i32_0 = arith.constant 0 : i32
    %c0_i32_1 = arith.constant 0 : i32
    return %c0_i32, %c0_i32_0 : i32, i32
  }
  func.func @transform_3(%arg0: i32) -> (i32, i32) {
    %c0_i32 = arith.constant 0 : i32
    %c0_i32_0 = arith.constant 0 : i32
    %c0_i32_1 = arith.constant 0 : i32
    return %c0_i32, %c0_i32_0 : i32, i32
  }
  func.func @transform_4(%arg0: i32) -> (i32, i32) {
    %c0_i32 = arith.constant 0 : i32
    %c0_i32_0 = arith.constant 0 : i32
    %c0_i32_1 = arith.constant 0 : i32
    return %c0_i32, %c0_i32_0 : i32, i32
  }
  func.func @transform_5(%arg0: i32) -> (i32, i32) {
    %c0_i32 = arith.constant 0 : i32
    %c0_i32_0 = arith.constant 0 : i32
    %c0_i32_1 = arith.constant 0 : i32
    return %c0_i32, %c0_i32_0 : i32, i32
  }
  func.func @transform_6(%arg0: i32) -> (i32, i32) {
    %c0_i32 = arith.constant 0 : i32
    %c0_i32_0 = arith.constant 0 : i32
    %c0_i32_1 = arith.constant 0 : i32
    return %c0_i32, %c0_i32_0 : i32, i32
  }
  func.func @transform_7(%arg0: i32) -> (i32, i32) {
    %c0_i32 = arith.constant 0 : i32
    %c0_i32_0 = arith.constant 0 : i32
    return %arg0, %c0_i32 : i32, i32
  }
  func.func @transform_8(%arg0: i32) -> (i32, i32) {
    %c0_i32 = arith.constant 0 : i32
    %c0_i32_0 = arith.constant 0 : i32
    return %arg0, %c0_i32 : i32, i32
  }
}

</mosaic_0001>

<llo_original>
// kernel: two_layer_net_forward.1
$region0: #{two_layer_net_forward.1}
  #allocation0 [shape = 'u32[]', space=smem, size = 0x4, offset = 0x4, fixed_abs, tag = 'smem constant byte address 0x4 - core index']
  #allocation1 [shape = 'u32[144,128]{1,0:T(1,128)}', space=vmem, size = 0x12000, scoped, tag = 'internal scratch']
  %s0 = inlined_call_operand.vmem [shape: f32[8,1024], index: 0, kind: input, shape index: {}]
  %s1 = inlined_call_operand.hbm [shape: f32[1024,512], index: 1, kind: input, shape index: {}]
  %s2 = inlined_call_operand.hbm [shape: f32[1,512], index: 2, kind: input, shape index: {}]
  %s3 = inlined_call_operand.hbm [shape: f32[512,128], index: 3, kind: input, shape index: {}]
  %s4 = inlined_call_operand.hbm [shape: f32[1,128], index: 4, kind: input, shape index: {}]
  %s5 = inlined_call_operand.hbm [shape: f32[128,128], index: 5, kind: input, shape index: {}]
  %s6 = inlined_call_operand.hbm [shape: f32[1,128], index: 6, kind: input, shape index: {}]
  %s7 = inlined_call_operand.vmem [shape: f32[8,128], index: 7, kind: output, shape index: {0}]
  %s8 = inlined_call_operand.vmem [shape: f32[8,128], index: 8, kind: output, shape index: {1}]
  %9 = xla_tuple %s7, %s8
  %s10 = sld [smem:[#allocation0]]
  $region70: #{two_layer_net_forward.1} parent=0
    _
  %s12 = ssub.s32 1, %s10
  %s13 = scalar_select 0, %s12, %s10
  $region1: #{two_layer_net_forward.1} parent=0
    #allocation2 [shape = 'u8[2097152]{0}', space=vmem, size = 0x200000, scoped, tag = 'input window, operand 1, single buffered']
    #allocation3 [shape = 's32[1]{0}', space=sflag, size = 0x4, scoped, tag = 'scoped memory for two_layer_net_forward.1']
    #allocation4 [shape = 'u8[2048]{0}', space=vmem, size = 0x800, scoped, tag = 'input window, operand 2, single buffered']
    #allocation5 [shape = 's32[1]{0}', space=sflag, size = 0x4, scoped, tag = 'scoped memory for two_layer_net_forward.1']
    #allocation6 [shape = 'u8[262144]{0}', space=vmem, size = 0x40000, scoped, tag = 'input window, operand 3, single buffered']
    #allocation7 [shape = 'u8[512]{0}', space=vmem, size = 0x400, scoped, tag = 'input window, operand 4, single buffered']
    #allocation8 [shape = 's32[1]{0}', space=sflag, size = 0x4, scoped, tag = 'scoped memory for two_layer_net_forward.1']
    #allocation9 [shape = 'u8[65536]{0}', space=vmem, size = 0x10000, scoped, tag = 'input window, operand 5, single buffered']
    #allocation10 [shape = 'u8[512]{0}', space=vmem, size = 0x400, scoped, tag = 'input window, operand 6, single buffered']
    #allocation11 [shape = 's32[1]{0}', space=sflag, size = 0x4, scoped, tag = 'scoped memory for two_layer_net_forward.1']
    %14 = vsyncpa [#allocation3], 0
    %15 = vsyncpa [#allocation5], 0
    %16 = vsyncpa [#allocation8], 0
    %17 = vsyncpa [#allocation11], 0
    // Predicated region
    $region2: #{two_layer_net_forward.1} parent=1 // pred_check
      _
    $region3: #{two_layer_net_forward.1} parent=1 // pred_check_branch
      %19 = sbr.rel (0) target = $region5
    $region4: #{two_layer_net_forward.1} parent=1 // pred_region
      _
    $region5: #{two_layer_net_forward.1} parent=1 // pred_fallthru
      _
    // Predicated region
    $region6: #{two_layer_net_forward.1} parent=1 // pred_check
      _
    $region7: #{two_layer_net_forward.1} parent=1 // pred_check_branch
      %21 = sbr.rel (0) target = $region9
    $region8: #{two_layer_net_forward.1} parent=1 // pred_region
      %s23 = ssub.s32 65536, 65536
      %24 = vsyncadd [#allocation3], %s23
      %s25 = sshll.u32 [#allocation2], 4
      %s26 = int_to_ptr.vmem [resolvable:$true] %s25
      %31 = dma.hbm_to_vmem [thread:$0]  %s1, 65536, %s26, [#allocation3], 512, 512, 32
    $region9: #{two_layer_net_forward.1} parent=1 // pred_fallthru
      _
    // Predicated region
    $region10: #{two_layer_net_forward.1} parent=1 // pred_check
      _
    $region11: #{two_layer_net_forward.1} parent=1 // pred_check_branch
      %33 = sbr.rel (0) target = $region13
    $region12: #{two_layer_net_forward.1} parent=1 // pred_region
      %s35 = ssub.s32 64, 64
      %36 = vsyncadd [#allocation5], %s35
      %s38 = sshll.u32 [#allocation4], 4
      %s39 = int_to_ptr.vmem [resolvable:$true] %s38
      %41 = dma.hbm_to_vmem [thread:$0]  %s2, 64, %s39, [#allocation5]
    $region13: #{two_layer_net_forward.1} parent=1 // pred_fallthru
      _
    // Predicated region
    $region14: #{two_layer_net_forward.1} parent=1 // pred_check
      _
    $region15: #{two_layer_net_forward.1} parent=1 // pred_check_branch
      %43 = sbr.rel (0) target = $region17
    $region16: #{two_layer_net_forward.1} parent=1 // pred_region
      %s45 = ssub.s32 8192, 8192
      %46 = vsyncadd [#allocation5], %s45
      %s47 = sshll.u32 [#allocation6], 4
      %s48 = int_to_ptr.vmem [resolvable:$true] %s47
      %53 = dma.hbm_to_vmem [thread:$0]  %s3, 8192, %s48, [#allocation5], 128, 128, 8
    $region17: #{two_layer_net_forward.1} parent=1 // pred_fallthru
      _
    // Predicated region
    $region18: #{two_layer_net_forward.1} parent=1 // pred_check
      _
    $region19: #{two_layer_net_forward.1} parent=1 // pred_check_branch
      %55 = sbr.rel (0) target = $region21
    $region20: #{two_layer_net_forward.1} parent=1 // pred_region
      %s57 = ssub.s32 16, 16
      %58 = vsyncadd [#allocation8], %s57
      %s60 = sshll.u32 [#allocation7], 4
      %s61 = int_to_ptr.vmem [resolvable:$true] %s60
      %63 = dma.hbm_to_vmem [thread:$0]  %s4, 16, %s61, [#allocation8]
    $region21: #{two_layer_net_forward.1} parent=1 // pred_fallthru
      _
    // Predicated region
    $region22: #{two_layer_net_forward.1} parent=1 // pred_check
      _
    $region23: #{two_layer_net_forward.1} parent=1 // pred_check_branch
      %65 = sbr.rel (0) target = $region25
    $region24: #{two_layer_net_forward.1} parent=1 // pred_region
      %s67 = ssub.s32 2048, 2048
      %68 = vsyncadd [#allocation8], %s67
      %s69 = sshll.u32 [#allocation9], 4
      %s70 = int_to_ptr.vmem [resolvable:$true] %s69
      %75 = dma.hbm_to_vmem [thread:$0]  %s5, 2048, %s70, [#allocation8], 128, 128, 8
    $region25: #{two_layer_net_forward.1} parent=1 // pred_fallthru
      _
    // Predicated region
    $region26: #{two_layer_net_forward.1} parent=1 // pred_check
      _
    $region27: #{two_layer_net_forward.1} parent=1 // pred_check_branch
      %77 = sbr.rel (0) target = $region29
    $region28: #{two_layer_net_forward.1} parent=1 // pred_region
      %s79 = ssub.s32 16, 16
      %80 = vsyncadd [#allocation11], %s79
      %s82 = sshll.u32 [#allocation10], 4
      %s83 = int_to_ptr.vmem [resolvable:$true] %s82
      %85 = dma.hbm_to_vmem [thread:$0]  %s6, 16, %s83, [#allocation11]
    $region29: #{two_layer_net_forward.1} parent=1 // pred_fallthru
      _
    // Predicated region
    $region30: #{two_layer_net_forward.1} parent=1 // pred_check
      _
    $region31: #{two_layer_net_forward.1} parent=1 // pred_check_branch
      %87 = sbr.rel (0) target = $region33
    $region32: #{two_layer_net_forward.1} parent=1 // pred_region
      %88 = dma.done [#allocation3], 65536
    $region33: #{two_layer_net_forward.1} parent=1 // pred_fallthru
      _
    // Predicated region
    $region34: #{two_layer_net_forward.1} parent=1 // pred_check
      _
    $region35: #{two_layer_net_forward.1} parent=1 // pred_check_branch
      %90 = sbr.rel (0) target = $region37
    $region36: #{two_layer_net_forward.1} parent=1 // pred_region
      %91 = dma.done [#allocation5], 64
    $region37: #{two_layer_net_forward.1} parent=1 // pred_fallthru
      _
    // Predicated region
    $region38: #{two_layer_net_forward.1} parent=1 // pred_check
      _
    $region39: #{two_layer_net_forward.1} parent=1 // pred_check_branch
      %93 = sbr.rel (0) target = $region41
    $region40: #{two_layer_net_forward.1} parent=1 // pred_region
      %94 = dma.done [#allocation5], 8192
    $region41: #{two_layer_net_forward.1} parent=1 // pred_fallthru
      _
    // Predicated region
    $region42: #{two_layer_net_forward.1} parent=1 // pred_check
      _
    $region43: #{two_layer_net_forward.1} parent=1 // pred_check_branch
      %96 = sbr.rel (0) target = $region45
    $region44: #{two_layer_net_forward.1} parent=1 // pred_region
      %97 = dma.done [#allocation8], 16
    $region45: #{two_layer_net_forward.1} parent=1 // pred_fallthru
      _
    // Predicated region
    $region46: #{two_layer_net_forward.1} parent=1 // pred_check
      _
    $region47: #{two_layer_net_forward.1} parent=1 // pred_check_branch
      %99 = sbr.rel (0) target = $region49
    $region48: #{two_layer_net_forward.1} parent=1 // pred_region
      %100 = dma.done [#allocation8], 2048
    $region49: #{two_layer_net_forward.1} parent=1 // pred_fallthru
      _
    // Predicated region
    $region50: #{two_layer_net_forward.1} parent=1 // pred_check
      _
    $region51: #{two_layer_net_forward.1} parent=1 // pred_check_branch
      %102 = sbr.rel (0) target = $region53
    $region52: #{two_layer_net_forward.1} parent=1 // pred_region
      %103 = dma.done [#allocation11], 16
    $region53: #{two_layer_net_forward.1} parent=1 // pred_fallthru
      _
    %v104 = vld [vmem:[%s0] sm:$0xff]
    %v105 = vld [vmem:[%s0 + $0x8] sm:$0xff]
    %v106 = vld [vmem:[%s0 + $0x10] sm:$0xff]
    %v107 = vld [vmem:[%s0 + $0x18] sm:$0xff]
    %v108 = vld [vmem:[%s0 + $0x20] sm:$0xff]
    %v109 = vld [vmem:[%s0 + $0x28] sm:$0xff]
    %v110 = vld [vmem:[%s0 + $0x30] sm:$0xff]
    %v111 = vld [vmem:[%s0 + $0x38] sm:$0xff]
    %v112 = vld [vmem:[#allocation2] sm:$0xff]
    %v113 = vld [vmem:[#allocation2 + $0x8] sm:$0xff]
    %v114 = vld [vmem:[#allocation2 + $0x10] sm:$0xff]
    %v115 = vld [vmem:[#allocation2 + $0x18] sm:$0xff]
    %v116 = vld [vmem:[#allocation2 + $0x20] sm:$0xff]
    %v117 = vld [vmem:[#allocation2 + $0x28] sm:$0xff]
    %v118 = vld [vmem:[#allocation2 + $0x30] sm:$0xff]
    %v119 = vld [vmem:[#allocation2 + $0x38] sm:$0xff]
    %v120 = vld [vmem:[#allocation2 + $0x40] sm:$0xff]
    %v121 = vld [vmem:[#allocation2 + $0x48] sm:$0xff]
    %v122 = vld [vmem:[#allocation2 + $0x50] sm:$0xff]
    %v123 = vld [vmem:[#allocation2 + $0x58] sm:$0xff]
    %v124 = vld [vmem:[#allocation2 + $0x60] sm:$0xff]
    %v125 = vld [vmem:[#allocation2 + $0x68] sm:$0xff]
    %v126 = vld [vmem:[#allocation2 + $0x70] sm:$0xff]
    %v127 = vld [vmem:[#allocation2 + $0x78] sm:$0xff]
    %v128 = vld [vmem:[#allocation2 + $0x80] sm:$0xff]
    %v129 = vld [vmem:[#allocation2 + $0x88] sm:$0xff]
    %v130 = vld [vmem:[#allocation2 + $0x90] sm:$0xff]
    %v131 = vld [vmem:[#allocation2 + $0x98] sm:$0xff]
    %v132 = vld [vmem:[#allocation2 + $0xa0] sm:$0xff]
    %v133 = vld [vmem:[#allocation2 + $0xa8] sm:$0xff]
    %v134 = vld [vmem:[#allocation2 + $0xb0] sm:$0xff]
    %v135 = vld [vmem:[#allocation2 + $0xb8] sm:$0xff]
    %v136 = vld [vmem:[#allocation2 + $0xc0] sm:$0xff]
    %v137 = vld [vmem:[#allocation2 + $0xc8] sm:$0xff]
    %v138 = vld [vmem:[#allocation2 + $0xd0] sm:$0xff]
    %v139 = vld [vmem:[#allocation2 + $0xd8] sm:$0xff]
    %v140 = vld [vmem:[#allocation2 + $0xe0] sm:$0xff]
    %v141 = vld [vmem:[#allocation2 + $0xe8] sm:$0xff]
    %v142 = vld [vmem:[#allocation2 + $0xf0] sm:$0xff]
    %v143 = vld [vmem:[#allocation2 + $0xf8] sm:$0xff]
    %v144 = vld [vmem:[#allocation2 + $0x100] sm:$0xff]
    %v145 = vld [vmem:[#allocation2 + $0x108] sm:$0xff]
    %v146 = vld [vmem:[#allocation2 + $0x110] sm:$0xff]
    %v147 = vld [vmem:[#allocation2 + $0x118] sm:$0xff]
    %v148 = vld [vmem:[#allocation2 + $0x120] sm:$0xff]
    %v149 = vld [vmem:[#allocation2 + $0x128] sm:$0xff]
    %v150 = vld [vmem:[#allocation2 + $0x130] sm:$0xff]
    %v151 = vld [vmem:[#allocation2 + $0x138] sm:$0xff]
    %v152 = vld [vmem:[#allocation2 + $0x140] sm:$0xff]
    %v153 = vld [vmem:[#allocation2 + $0x148] sm:$0xff]
    %v154 = vld [vmem:[#allocation2 + $0x150] sm:$0xff]
    %v155 = vld [vmem:[#allocation2 + $0x158] sm:$0xff]
    %v156 = vld [vmem:[#allocation2 + $0x160] sm:$0xff]
    %v157 = vld [vmem:[#allocation2 + $0x168] sm:$0xff]
    %v158 = vld [vmem:[#allocation2 + $0x170] sm:$0xff]
    %v159 = vld [vmem:[#allocation2 + $0x178] sm:$0xff]
    %v160 = vld [vmem:[#allocation2 + $0x180] sm:$0xff]
    %v161 = vld [vmem:[#allocation2 + $0x188] sm:$0xff]
    %v162 = vld [vmem:[#allocation2 + $0x190] sm:$0xff]
    %v163 = vld [vmem:[#allocation2 + $0x198] sm:$0xff]
    %v164 = vld [vmem:[#allocation2 + $0x1a0] sm:$0xff]
    %v165 = vld [vmem:[#allocation2 + $0x1a8] sm:$0xff]
    %v166 = vld [vmem:[#allocation2 + $0x1b0] sm:$0xff]
    %v167 = vld [vmem:[#allocation2 + $0x1b8] sm:$0xff]
    %v168 = vld [vmem:[#allocation2 + $0x1c0] sm:$0xff]
    %v169 = vld [vmem:[#allocation2 + $0x1c8] sm:$0xff]
    %v170 = vld [vmem:[#allocation2 + $0x1d0] sm:$0xff]
    %v171 = vld [vmem:[#allocation2 + $0x1d8] sm:$0xff]
    %v172 = vld [vmem:[#allocation2 + $0x1e0] sm:$0xff]
    %v173 = vld [vmem:[#allocation2 + $0x1e8] sm:$0xff]
    %v174 = vld [vmem:[#allocation2 + $0x1f0] sm:$0xff]
    %v175 = vld [vmem:[#allocation2 + $0x1f8] sm:$0xff]
    %v176 = vld [vmem:[#allocation2 + $0x200] sm:$0xff]
    %v177 = vld [vmem:[#allocation2 + $0x208] sm:$0xff]
    %v178 = vld [vmem:[#allocation2 + $0x210] sm:$0xff]
    %v179 = vld [vmem:[#allocation2 + $0x218] sm:$0xff]
    %v180 = vld [vmem:[#allocation2 + $0x220] sm:$0xff]
    %v181 = vld [vmem:[#allocation2 + $0x228] sm:$0xff]
    %v182 = vld [vmem:[#allocation2 + $0x230] sm:$0xff]
    %v183 = vld [vmem:[#allocation2 + $0x238] sm:$0xff]
    %v184 = vld [vmem:[#allocation2 + $0x240] sm:$0xff]
    %v185 = vld [vmem:[#allocation2 + $0x248] sm:$0xff]
    %v186 = vld [vmem:[#allocation2 + $0x250] sm:$0xff]
    %v187 = vld [vmem:[#allocation2 + $0x258] sm:$0xff]
    %v188 = vld [vmem:[#allocation2 + $0x260] sm:$0xff]
    %v189 = vld [vmem:[#allocation2 + $0x268] sm:$0xff]
    %v190 = vld [vmem:[#allocation2 + $0x270] sm:$0xff]
    %v191 = vld [vmem:[#allocation2 + $0x278] sm:$0xff]
    %v192 = vld [vmem:[#allocation2 + $0x280] sm:$0xff]
    %v193 = vld [vmem:[#allocation2 + $0x288] sm:$0xff]
    %v194 = vld [vmem:[#allocation2 + $0x290] sm:$0xff]
    %v195 = vld [vmem:[#allocation2 + $0x298] sm:$0xff]
    %v196 = vld [vmem:[#allocation2 + $0x2a0] sm:$0xff]
    %v197 = vld [vmem:[#allocation2 + $0x2a8] sm:$0xff]
    %v198 = vld [vmem:[#allocation2 + $0x2b0] sm:$0xff]
    %v199 = vld [vmem:[#allocation2 + $0x2b8] sm:$0xff]
    %v200 = vld [vmem:[#allocation2 + $0x2c0] sm:$0xff]
    %v201 = vld [vmem:[#allocation2 + $0x2c8] sm:$0xff]
    %v202 = vld [vmem:[#allocation2 + $0x2d0] sm:$0xff]
    %v203 = vld [vmem:[#allocation2 + $0x2d8] sm:$0xff]
    %v204 = vld [vmem:[#allocation2 + $0x2e0] sm:$0xff]
    %v205 = vld [vmem:[#allocation2 + $0x2e8] sm:$0xff]
    %v206 = vld [vmem:[#allocation2 + $0x2f0] sm:$0xff]
    %v207 = vld [vmem:[#allocation2 + $0x2f8] sm:$0xff]
    %v208 = vld [vmem:[#allocation2 + $0x300] sm:$0xff]
    %v209 = vld [vmem:[#allocation2 + $0x308] sm:$0xff]
    %v210 = vld [vmem:[#allocation2 + $0x310] sm:$0xff]
    %v211 = vld [vmem:[#allocation2 + $0x318] sm:$0xff]
    %v212 = vld [vmem:[#allocation2 + $0x320] sm:$0xff]
    %v213 = vld [vmem:[#allocation2 + $0x328] sm:$0xff]
    %v214 = vld [vmem:[#allocation2 + $0x330] sm:$0xff]
    %v215 = vld [vmem:[#allocation2 + $0x338] sm:$0xff]
    %v216 = vld [vmem:[#allocation2 + $0x340] sm:$0xff]
    %v217 = vld [vmem:[#allocation2 + $0x348] sm:$0xff]
    %v218 = vld [vmem:[#allocation2 + $0x350] sm:$0xff]
    %v219 = vld [vmem:[#allocation2 + $0x358] sm:$0xff]
    %v220 = vld [vmem:[#allocation2 + $0x360] sm:$0xff]
    %v221 = vld [vmem:[#allocation2 + $0x368] sm:$0xff]
    %v222 = vld [vmem:[#allocation2 + $0x370] sm:$0xff]
    %v223 = vld [vmem:[#allocation2 + $0x378] sm:$0xff]
    %v224 = vld [vmem:[#allocation2 + $0x380] sm:$0xff]
    %v225 = vld [vmem:[#allocation2 + $0x388] sm:$0xff]
    %v226 = vld [vmem:[#allocation2 + $0x390] sm:$0xff]
    %v227 = vld [vmem:[#allocation2 + $0x398] sm:$0xff]
    %v228 = vld [vmem:[#allocation2 + $0x3a0] sm:$0xff]
    %v229 = vld [vmem:[#allocation2 + $0x3a8] sm:$0xff]
    %v230 = vld [vmem:[#allocation2 + $0x3b0] sm:$0xff]
    %v231 = vld [vmem:[#allocation2 + $0x3b8] sm:$0xff]
    %v232 = vld [vmem:[#allocation2 + $0x3c0] sm:$0xff]
    %v233 = vld [vmem:[#allocation2 + $0x3c8] sm:$0xff]
    %v234 = vld [vmem:[#allocation2 + $0x3d0] sm:$0xff]
    %v235 = vld [vmem:[#allocation2 + $0x3d8] sm:$0xff]
    %v236 = vld [vmem:[#allocation2 + $0x3e0] sm:$0xff]
    %v237 = vld [vmem:[#allocation2 + $0x3e8] sm:$0xff]
    %v238 = vld [vmem:[#allocation2 + $0x3f0] sm:$0xff]
    %v239 = vld [vmem:[#allocation2 + $0x3f8] sm:$0xff]
    %v240 = vld [vmem:[#allocation2 + $0x400] sm:$0xff]
    %v241 = vld [vmem:[#allocation2 + $0x408] sm:$0xff]
    %v242 = vld [vmem:[#allocation2 + $0x410] sm:$0xff]
    %v243 = vld [vmem:[#allocation2 + $0x418] sm:$0xff]
    %v244 = vld [vmem:[#allocation2 + $0x420] sm:$0xff]
    %v245 = vld [vmem:[#allocation2 + $0x428] sm:$0xff]
    %v246 = vld [vmem:[#allocation2 + $0x430] sm:$0xff]
    %v247 = vld [vmem:[#allocation2 + $0x438] sm:$0xff]
    %v248 = vld [vmem:[#allocation2 + $0x440] sm:$0xff]
    %v249 = vld [vmem:[#allocation2 + $0x448] sm:$0xff]
    %v250 = vld [vmem:[#allocation2 + $0x450] sm:$0xff]
    %v251 = vld [vmem:[#allocation2 + $0x458] sm:$0xff]
    %v252 = vld [vmem:[#allocation2 + $0x460] sm:$0xff]
    %v253 = vld [vmem:[#allocation2 + $0x468] sm:$0xff]
    %v254 = vld [vmem:[#allocation2 + $0x470] sm:$0xff]
    %v255 = vld [vmem:[#allocation2 + $0x478] sm:$0xff]
    %v256 = vld [vmem:[#allocation2 + $0x480] sm:$0xff]
    %v257 = vld [vmem:[#allocation2 + $0x488] sm:$0xff]
    %v258 = vld [vmem:[#allocation2 + $0x490] sm:$0xff]
    %v259 = vld [vmem:[#allocation2 + $0x498] sm:$0xff]
    %v260 = vld [vmem:[#allocation2 + $0x4a0] sm:$0xff]
    %v261 = vld [vmem:[#allocation2 + $0x4a8] sm:$0xff]
    %v262 = vld [vmem:[#allocation2 + $0x4b0] sm:$0xff]
    %v263 = vld [vmem:[#allocation2 + $0x4b8] sm:$0xff]
    %v264 = vld [vmem:[#allocation2 + $0x4c0] sm:$0xff]
    %v265 = vld [vmem:[#allocation2 + $0x4c8] sm:$0xff]
    %v266 = vld [vmem:[#allocation2 + $0x4d0] sm:$0xff]
    %v267 = vld [vmem:[#allocation2 + $0x4d8] sm:$0xff]
    %v268 = vld [vmem:[#allocation2 + $0x4e0] sm:$0xff]
    %v269 = vld [vmem:[#allocation2 + $0x4e8] sm:$0xff]
    %v270 = vld [vmem:[#allocation2 + $0x4f0] sm:$0xff]
    %v271 = vld [vmem:[#allocation2 + $0x4f8] sm:$0xff]
    %v272 = vld [vmem:[#allocation2 + $0x500] sm:$0xff]
    %v273 = vld [vmem:[#allocation2 + $0x508] sm:$0xff]
    %v274 = vld [vmem:[#allocation2 + $0x510] sm:$0xff]
    %v275 = vld [vmem:[#allocation2 + $0x518] sm:$0xff]
    %v276 = vld [vmem:[#allocation2 + $0x520] sm:$0xff]
    %v277 = vld [vmem:[#allocation2 + $0x528] sm:$0xff]
    %v278 = vld [vmem:[#allocation2 + $0x530] sm:$0xff]
    %v279 = vld [vmem:[#allocation2 + $0x538] sm:$0xff]
    %v280 = vld [vmem:[#allocation2 + $0x540] sm:$0xff]
    %v281 = vld [vmem:[#allocation2 + $0x548] sm:$0xff]
    %v282 = vld [vmem:[#allocation2 + $0x550] sm:$0xff]
    %v283 = vld [vmem:[#allocation2 + $0x558] sm:$0xff]
    %v284 = vld [vmem:[#allocation2 + $0x560] sm:$0xff]
    %v285 = vld [vmem:[#allocation2 + $0x568] sm:$0xff]
    %v286 = vld [vmem:[#allocation2 + $0x570] sm:$0xff]
    %v287 = vld [vmem:[#allocation2 + $0x578] sm:$0xff]
    %v288 = vld [vmem:[#allocation2 + $0x580] sm:$0xff]
    %v289 = vld [vmem:[#allocation2 + $0x588] sm:$0xff]
    %v290 = vld [vmem:[#allocation2 + $0x590] sm:$0xff]
    %v291 = vld [vmem:[#allocation2 + $0x598] sm:$0xff]
    %v292 = vld [vmem:[#allocation2 + $0x5a0] sm:$0xff]
    %v293 = vld [vmem:[#allocation2 + $0x5a8] sm:$0xff]
    %v294 = vld [vmem:[#allocation2 + $0x5b0] sm:$0xff]
    %v295 = vld [vmem:[#allocation2 + $0x5b8] sm:$0xff]
    %v296 = vld [vmem:[#allocation2 + $0x5c0] sm:$0xff]
    %v297 = vld [vmem:[#allocation2 + $0x5c8] sm:$0xff]
    %v298 = vld [vmem:[#allocation2 + $0x5d0] sm:$0xff]
    %v299 = vld [vmem:[#allocation2 + $0x5d8] sm:$0xff]
    %v300 = vld [vmem:[#allocation2 + $0x5e0] sm:$0xff]
    %v301 = vld [vmem:[#allocation2 + $0x5e8] sm:$0xff]
    %v302 = vld [vmem:[#allocation2 + $0x5f0] sm:$0xff]
    %v303 = vld [vmem:[#allocation2 + $0x5f8] sm:$0xff]
    %v304 = vld [vmem:[#allocation2 + $0x600] sm:$0xff]
    %v305 = vld [vmem:[#allocation2 + $0x608] sm:$0xff]
    %v306 = vld [vmem:[#allocation2 + $0x610] sm:$0xff]
    %v307 = vld [vmem:[#allocation2 + $0x618] sm:$0xff]
    %v308 = vld [vmem:[#allocation2 + $0x620] sm:$0xff]
    %v309 = vld [vmem:[#allocation2 + $0x628] sm:$0xff]
    %v310 = vld [vmem:[#allocation2 + $0x630] sm:$0xff]
    %v311 = vld [vmem:[#allocation2 + $0x638] sm:$0xff]
    %v312 = vld [vmem:[#allocation2 + $0x640] sm:$0xff]
    %v313 = vld [vmem:[#allocation2 + $0x648] sm:$0xff]
    %v314 = vld [vmem:[#allocation2 + $0x650] sm:$0xff]
    %v315 = vld [vmem:[#allocation2 + $0x658] sm:$0xff]
    %v316 = vld [vmem:[#allocation2 + $0x660] sm:$0xff]
    %v317 = vld [vmem:[#allocation2 + $0x668] sm:$0xff]
    %v318 = vld [vmem:[#allocation2 + $0x670] sm:$0xff]
    %v319 = vld [vmem:[#allocation2 + $0x678] sm:$0xff]
    %v320 = vld [vmem:[#allocation2 + $0x680] sm:$0xff]
    %v321 = vld [vmem:[#allocation2 + $0x688] sm:$0xff]
    %v322 = vld [vmem:[#allocation2 + $0x690] sm:$0xff]
    %v323 = vld [vmem:[#allocation2 + $0x698] sm:$0xff]
    %v324 = vld [vmem:[#allocation2 + $0x6a0] sm:$0xff]
    %v325 = vld [vmem:[#allocation2 + $0x6a8] sm:$0xff]
    %v326 = vld [vmem:[#allocation2 + $0x6b0] sm:$0xff]
    %v327 = vld [vmem:[#allocation2 + $0x6b8] sm:$0xff]
    %v328 = vld [vmem:[#allocation2 + $0x6c0] sm:$0xff]
    %v329 = vld [vmem:[#allocation2 + $0x6c8] sm:$0xff]
    %v330 = vld [vmem:[#allocation2 + $0x6d0] sm:$0xff]
    %v331 = vld [vmem:[#allocation2 + $0x6d8] sm:$0xff]
    %v332 = vld [vmem:[#allocation2 + $0x6e0] sm:$0xff]
    %v333 = vld [vmem:[#allocation2 + $0x6e8] sm:$0xff]
    %v334 = vld [vmem:[#allocation2 + $0x6f0] sm:$0xff]
    %v335 = vld [vmem:[#allocation2 + $0x6f8] sm:$0xff]
    %v336 = vld [vmem:[#allocation2 + $0x700] sm:$0xff]
    %v337 = vld [vmem:[#allocation2 + $0x708] sm:$0xff]
    %v338 = vld [vmem:[#allocation2 + $0x710] sm:$0xff]
    %v339 = vld [vmem:[#allocation2 + $0x718] sm:$0xff]
    %v340 = vld [vmem:[#allocation2 + $0x720] sm:$0xff]
    %v341 = vld [vmem:[#allocation2 + $0x728] sm:$0xff]
    %v342 = vld [vmem:[#allocation2 + $0x730] sm:$0xff]
    %v343 = vld [vmem:[#allocation2 + $0x738] sm:$0xff]
    %v344 = vld [vmem:[#allocation2 + $0x740] sm:$0xff]
    %v345 = vld [vmem:[#allocation2 + $0x748] sm:$0xff]
    %v346 = vld [vmem:[#allocation2 + $0x750] sm:$0xff]
    %v347 = vld [vmem:[#allocation2 + $0x758] sm:$0xff]
    %v348 = vld [vmem:[#allocation2 + $0x760] sm:$0xff]
    %v349 = vld [vmem:[#allocation2 + $0x768] sm:$0xff]
    %v350 = vld [vmem:[#allocation2 + $0x770] sm:$0xff]
    %v351 = vld [vmem:[#allocation2 + $0x778] sm:$0xff]
    %v352 = vld [vmem:[#allocation2 + $0x780] sm:$0xff]
    %v353 = vld [vmem:[#allocation2 + $0x788] sm:$0xff]
    %v354 = vld [vmem:[#allocation2 + $0x790] sm:$0xff]
    %v355 = vld [vmem:[#allocation2 + $0x798] sm:$0xff]
    %v356 = vld [vmem:[#allocation2 + $0x7a0] sm:$0xff]
    %v357 = vld [vmem:[#allocation2 + $0x7a8] sm:$0xff]
    %v358 = vld [vmem:[#allocation2 + $0x7b0] sm:$0xff]
    %v359 = vld [vmem:[#allocation2 + $0x7b8] sm:$0xff]
    %v360 = vld [vmem:[#allocation2 + $0x7c0] sm:$0xff]
    %v361 = vld [vmem:[#allocation2 + $0x7c8] sm:$0xff]
    %v362 = vld [vmem:[#allocation2 + $0x7d0] sm:$0xff]
    %v363 = vld [vmem:[#allocation2 + $0x7d8] sm:$0xff]
    %v364 = vld [vmem:[#allocation2 + $0x7e0] sm:$0xff]
    %v365 = vld [vmem:[#allocation2 + $0x7e8] sm:$0xff]
    %v366 = vld [vmem:[#allocation2 + $0x7f0] sm:$0xff]
    %v367 = vld [vmem:[#allocation2 + $0x7f8] sm:$0xff]
    %v368 = vld [vmem:[#allocation2 + $0x800] sm:$0xff]
    %v369 = vld [vmem:[#allocation2 + $0x808] sm:$0xff]
    %v370 = vld [vmem:[#allocation2 + $0x810] sm:$0xff]
    %v371 = vld [vmem:[#allocation2 + $0x818] sm:$0xff]
    %v372 = vld [vmem:[#allocation2 + $0x820] sm:$0xff]
    %v373 = vld [vmem:[#allocation2 + $0x828] sm:$0xff]
    %v374 = vld [vmem:[#allocation2 + $0x830] sm:$0xff]
    %v375 = vld [vmem:[#allocation2 + $0x838] sm:$0xff]
    %v376 = vld [vmem:[#allocation2 + $0x840] sm:$0xff]
    %v377 = vld [vmem:[#allocation2 + $0x848] sm:$0xff]
    %v378 = vld [vmem:[#allocation2 + $0x850] sm:$0xff]
    %v379 = vld [vmem:[#allocation2 + $0x858] sm:$0xff]
    %v380 = vld [vmem:[#allocation2 + $0x860] sm:$0xff]
    %v381 = vld [vmem:[#allocation2 + $0x868] sm:$0xff]
    %v382 = vld [vmem:[#allocation2 + $0x870] sm:$0xff]
    %v383 = vld [vmem:[#allocation2 + $0x878] sm:$0xff]
    %v384 = vld [vmem:[#allocation2 + $0x880] sm:$0xff]
    %v385 = vld [vmem:[#allocation2 + $0x888] sm:$0xff]
    %v386 = vld [vmem:[#allocation2 + $0x890] sm:$0xff]
    %v387 = vld [vmem:[#allocation2 + $0x898] sm:$0xff]
    %v388 = vld [vmem:[#allocation2 + $0x8a0] sm:$0xff]
    %v389 = vld [vmem:[#allocation2 + $0x8a8] sm:$0xff]
    %v390 = vld [vmem:[#allocation2 + $0x8b0] sm:$0xff]
    %v391 = vld [vmem:[#allocation2 + $0x8b8] sm:$0xff]
    %v392 = vld [vmem:[#allocation2 + $0x8c0] sm:$0xff]
    %v393 = vld [vmem:[#allocation2 + $0x8c8] sm:$0xff]
    %v394 = vld [vmem:[#allocation2 + $0x8d0] sm:$0xff]
    %v395 = vld [vmem:[#allocation2 + $0x8d8] sm:$0xff]
    %v396 = vld [vmem:[#allocation2 + $0x8e0] sm:$0xff]
    %v397 = vld [vmem:[#allocation2 + $0x8e8] sm:$0xff]
    %v398 = vld [vmem:[#allocation2 + $0x8f0] sm:$0xff]
    %v399 = vld [vmem:[#allocation2 + $0x8f8] sm:$0xff]
    %v400 = vld [vmem:[#allocation2 + $0x900] sm:$0xff]
    %v401 = vld [vmem:[#allocation2 + $0x908] sm:$0xff]
    %v402 = vld [vmem:[#allocation2 + $0x910] sm:$0xff]
    %v403 = vld [vmem:[#allocation2 + $0x918] sm:$0xff]
    %v404 = vld [vmem:[#allocation2 + $0x920] sm:$0xff]
    %v405 = vld [vmem:[#allocation2 + $0x928] sm:$0xff]
    %v406 = vld [vmem:[#allocation2 + $0x930] sm:$0xff]
    %v407 = vld [vmem:[#allocation2 + $0x938] sm:$0xff]
    %v408 = vld [vmem:[#allocation2 + $0x940] sm:$0xff]
    %v409 = vld [vmem:[#allocation2 + $0x948] sm:$0xff]
    %v410 = vld [vmem:[#allocation2 + $0x950] sm:$0xff]
    %v411 = vld [vmem:[#allocation2 + $0x958] sm:$0xff]
    %v412 = vld [vmem:[#allocation2 + $0x960] sm:$0xff]
    %v413 = vld [vmem:[#allocation2 + $0x968] sm:$0xff]
    %v414 = vld [vmem:[#allocation2 + $0x970] sm:$0xff]
    %v415 = vld [vmem:[#allocation2 + $0x978] sm:$0xff]
    %v416 = vld [vmem:[#allocation2 + $0x980] sm:$0xff]
    %v417 = vld [vmem:[#allocation2 + $0x988] sm:$0xff]
    %v418 = vld [vmem:[#allocation2 + $0x990] sm:$0xff]
    %v419 = vld [vmem:[#allocation2 + $0x998] sm:$0xff]
    %v420 = vld [vmem:[#allocation2 + $0x9a0] sm:$0xff]
    %v421 = vld [vmem:[#allocation2 + $0x9a8] sm:$0xff]
    %v422 = vld [vmem:[#allocation2 + $0x9b0] sm:$0xff]
    %v423 = vld [vmem:[#allocation2 + $0x9b8] sm:$0xff]
    %v424 = vld [vmem:[#allocation2 + $0x9c0] sm:$0xff]
    %v425 = vld [vmem:[#allocation2 + $0x9c8] sm:$0xff]
    %v426 = vld [vmem:[#allocation2 + $0x9d0] sm:$0xff]
    %v427 = vld [vmem:[#allocation2 + $0x9d8] sm:$0xff]
    %v428 = vld [vmem:[#allocation2 + $0x9e0] sm:$0xff]
    %v429 = vld [vmem:[#allocation2 + $0x9e8] sm:$0xff]
    %v430 = vld [vmem:[#allocation2 + $0x9f0] sm:$0xff]
    %v431 = vld [vmem:[#allocation2 + $0x9f8] sm:$0xff]
    %v432 = vld [vmem:[#allocation2 + $0xa00] sm:$0xff]
    %v433 = vld [vmem:[#allocation2 + $0xa08] sm:$0xff]
    %v434 = vld [vmem:[#allocation2 + $0xa10] sm:$0xff]
    %v435 = vld [vmem:[#allocation2 + $0xa18] sm:$0xff]
    %v436 = vld [vmem:[#allocation2 + $0xa20] sm:$0xff]
    %v437 = vld [vmem:[#allocation2 + $0xa28] sm:$0xff]
    %v438 = vld [vmem:[#allocation2 + $0xa30] sm:$0xff]
    %v439 = vld [vmem:[#allocation2 + $0xa38] sm:$0xff]
    %v440 = vld [vmem:[#allocation2 + $0xa40] sm:$0xff]
    %v441 = vld [vmem:[#allocation2 + $0xa48] sm:$0xff]
    %v442 = vld [vmem:[#allocation2 + $0xa50] sm:$0xff]
    %v443 = vld [vmem:[#allocation2 + $0xa58] sm:$0xff]
    %v444 = vld [vmem:[#allocation2 + $0xa60] sm:$0xff]
    %v445 = vld [vmem:[#allocation2 + $0xa68] sm:$0xff]
    %v446 = vld [vmem:[#allocation2 + $0xa70] sm:$0xff]
    %v447 = vld [vmem:[#allocation2 + $0xa78] sm:$0xff]
    %v448 = vld [vmem:[#allocation2 + $0xa80] sm:$0xff]
    %v449 = vld [vmem:[#allocation2 + $0xa88] sm:$0xff]
    %v450 = vld [vmem:[#allocation2 + $0xa90] sm:$0xff]
    %v451 = vld [vmem:[#allocation2 + $0xa98] sm:$0xff]
    %v452 = vld [vmem:[#allocation2 + $0xaa0] sm:$0xff]
    %v453 = vld [vmem:[#allocation2 + $0xaa8] sm:$0xff]
    %v454 = vld [vmem:[#allocation2 + $0xab0] sm:$0xff]
    %v455 = vld [vmem:[#allocation2 + $0xab8] sm:$0xff]
    %v456 = vld [vmem:[#allocation2 + $0xac0] sm:$0xff]
    %v457 = vld [vmem:[#allocation2 + $0xac8] sm:$0xff]
    %v458 = vld [vmem:[#allocation2 + $0xad0] sm:$0xff]
    %v459 = vld [vmem:[#allocation2 + $0xad8] sm:$0xff]
    %v460 = vld [vmem:[#allocation2 + $0xae0] sm:$0xff]
    %v461 = vld [vmem:[#allocation2 + $0xae8] sm:$0xff]
    %v462 = vld [vmem:[#allocation2 + $0xaf0] sm:$0xff]
    %v463 = vld [vmem:[#allocation2 + $0xaf8] sm:$0xff]
    %v464 = vld [vmem:[#allocation2 + $0xb00] sm:$0xff]
    %v465 = vld [vmem:[#allocation2 + $0xb08] sm:$0xff]
    %v466 = vld [vmem:[#allocation2 + $0xb10] sm:$0xff]
    %v467 = vld [vmem:[#allocation2 + $0xb18] sm:$0xff]
    %v468 = vld [vmem:[#allocation2 + $0xb20] sm:$0xff]
    %v469 = vld [vmem:[#allocation2 + $0xb28] sm:$0xff]
    %v470 = vld [vmem:[#allocation2 + $0xb30] sm:$0xff]
    %v471 = vld [vmem:[#allocation2 + $0xb38] sm:$0xff]
    %v472 = vld [vmem:[#allocation2 + $0xb40] sm:$0xff]
    %v473 = vld [vmem:[#allocation2 + $0xb48] sm:$0xff]
    %v474 = vld [vmem:[#allocation2 + $0xb50] sm:$0xff]
    %v475 = vld [vmem:[#allocation2 + $0xb58] sm:$0xff]
    %v476 = vld [vmem:[#allocation2 + $0xb60] sm:$0xff]
    %v477 = vld [vmem:[#allocation2 + $0xb68] sm:$0xff]
    %v478 = vld [vmem:[#allocation2 + $0xb70] sm:$0xff]
    %v479 = vld [vmem:[#allocation2 + $0xb78] sm:$0xff]
    %v480 = vld [vmem:[#allocation2 + $0xb80] sm:$0xff]
    %v481 = vld [vmem:[#allocation2 + $0xb88] sm:$0xff]
    %v482 = vld [vmem:[#allocation2 + $0xb90] sm:$0xff]
    %v483 = vld [vmem:[#allocation2 + $0xb98] sm:$0xff]
    %v484 = vld [vmem:[#allocation2 + $0xba0] sm:$0xff]
    %v485 = vld [vmem:[#allocation2 + $0xba8] sm:$0xff]
    %v486 = vld [vmem:[#allocation2 + $0xbb0] sm:$0xff]
    %v487 = vld [vmem:[#allocation2 + $0xbb8] sm:$0xff]
    %v488 = vld [vmem:[#allocation2 + $0xbc0] sm:$0xff]
    %v489 = vld [vmem:[#allocation2 + $0xbc8] sm:$0xff]
    %v490 = vld [vmem:[#allocation2 + $0xbd0] sm:$0xff]
    %v491 = vld [vmem:[#allocation2 + $0xbd8] sm:$0xff]
    %v492 = vld [vmem:[#allocation2 + $0xbe0] sm:$0xff]
    %v493 = vld [vmem:[#allocation2 + $0xbe8] sm:$0xff]
    %v494 = vld [vmem:[#allocation2 + $0xbf0] sm:$0xff]
    %v495 = vld [vmem:[#allocation2 + $0xbf8] sm:$0xff]
    %v496 = vld [vmem:[#allocation2 + $0xc00] sm:$0xff]
    %v497 = vld [vmem:[#allocation2 + $0xc08] sm:$0xff]
    %v498 = vld [vmem:[#allocation2 + $0xc10] sm:$0xff]
    %v499 = vld [vmem:[#allocation2 + $0xc18] sm:$0xff]
    %v500 = vld [vmem:[#allocation2 + $0xc20] sm:$0xff]
    %v501 = vld [vmem:[#allocation2 + $0xc28] sm:$0xff]
    %v502 = vld [vmem:[#allocation2 + $0xc30] sm:$0xff]
    %v503 = vld [vmem:[#allocation2 + $0xc38] sm:$0xff]
    %v504 = vld [vmem:[#allocation2 + $0xc40] sm:$0xff]
    %v505 = vld [vmem:[#allocation2 + $0xc48] sm:$0xff]
    %v506 = vld [vmem:[#allocation2 + $0xc50] sm:$0xff]
    %v507 = vld [vmem:[#allocation2 + $0xc58] sm:$0xff]
    %v508 = vld [vmem:[#allocation2 + $0xc60] sm:$0xff]
    %v509 = vld [vmem:[#allocation2 + $0xc68] sm:$0xff]
    %v510 = vld [vmem:[#allocation2 + $0xc70] sm:$0xff]
    %v511 = vld [vmem:[#allocation2 + $0xc78] sm:$0xff]
    %v512 = vld [vmem:[#allocation2 + $0xc80] sm:$0xff]
    %v513 = vld [vmem:[#allocation2 + $0xc88] sm:$0xff]
    %v514 = vld [vmem:[#allocation2 + $0xc90] sm:$0xff]
    %v515 = vld [vmem:[#allocation2 + $0xc98] sm:$0xff]
    %v516 = vld [vmem:[#allocation2 + $0xca0] sm:$0xff]
    %v517 = vld [vmem:[#allocation2 + $0xca8] sm:$0xff]
    %v518 = vld [vmem:[#allocation2 + $0xcb0] sm:$0xff]
    %v519 = vld [vmem:[#allocation2 + $0xcb8] sm:$0xff]
    %v520 = vld [vmem:[#allocation2 + $0xcc0] sm:$0xff]
    %v521 = vld [vmem:[#allocation2 + $0xcc8] sm:$0xff]
    %v522 = vld [vmem:[#allocation2 + $0xcd0] sm:$0xff]
    %v523 = vld [vmem:[#allocation2 + $0xcd8] sm:$0xff]
    %v524 = vld [vmem:[#allocation2 + $0xce0] sm:$0xff]
    %v525 = vld [vmem:[#allocation2 + $0xce8] sm:$0xff]
    %v526 = vld [vmem:[#allocation2 + $0xcf0] sm:$0xff]
    %v527 = vld [vmem:[#allocation2 + $0xcf8] sm:$0xff]
    %v528 = vld [vmem:[#allocation2 + $0xd00] sm:$0xff]
    %v529 = vld [vmem:[#allocation2 + $0xd08] sm:$0xff]
    %v530 = vld [vmem:[#allocation2 + $0xd10] sm:$0xff]
    %v531 = vld [vmem:[#allocation2 + $0xd18] sm:$0xff]
    %v532 = vld [vmem:[#allocation2 + $0xd20] sm:$0xff]
    %v533 = vld [vmem:[#allocation2 + $0xd28] sm:$0xff]
    %v534 = vld [vmem:[#allocation2 + $0xd30] sm:$0xff]
    %v535 = vld [vmem:[#allocation2 + $0xd38] sm:$0xff]
    %v536 = vld [vmem:[#allocation2 + $0xd40] sm:$0xff]
    %v537 = vld [vmem:[#allocation2 + $0xd48] sm:$0xff]
    %v538 = vld [vmem:[#allocation2 + $0xd50] sm:$0xff]
    %v539 = vld [vmem:[#allocation2 + $0xd58] sm:$0xff]
    %v540 = vld [vmem:[#allocation2 + $0xd60] sm:$0xff]
    %v541 = vld [vmem:[#allocation2 + $0xd68] sm:$0xff]
    %v542 = vld [vmem:[#allocation2 + $0xd70] sm:$0xff]
    %v543 = vld [vmem:[#allocation2 + $0xd78] sm:$0xff]
    %v544 = vld [vmem:[#allocation2 + $0xd80] sm:$0xff]
    %v545 = vld [vmem:[#allocation2 + $0xd88] sm:$0xff]
    %v546 = vld [vmem:[#allocation2 + $0xd90] sm:$0xff]
    %v547 = vld [vmem:[#allocation2 + $0xd98] sm:$0xff]
    %v548 = vld [vmem:[#allocation2 + $0xda0] sm:$0xff]
    %v549 = vld [vmem:[#allocation2 + $0xda8] sm:$0xff]
    %v550 = vld [vmem:[#allocation2 + $0xdb0] sm:$0xff]
    %v551 = vld [vmem:[#allocation2 + $0xdb8] sm:$0xff]
    %v552 = vld [vmem:[#allocation2 + $0xdc0] sm:$0xff]
    %v553 = vld [vmem:[#allocation2 + $0xdc8] sm:$0xff]
    %v554 = vld [vmem:[#allocation2 + $0xdd0] sm:$0xff]
    %v555 = vld [vmem:[#allocation2 + $0xdd8] sm:$0xff]
    %v556 = vld [vmem:[#allocation2 + $0xde0] sm:$0xff]
    %v557 = vld [vmem:[#allocation2 + $0xde8] sm:$0xff]
    %v558 = vld [vmem:[#allocation2 + $0xdf0] sm:$0xff]
    %v559 = vld [vmem:[#allocation2 + $0xdf8] sm:$0xff]
    %v560 = vld [vmem:[#allocation2 + $0xe00] sm:$0xff]
    %v561 = vld [vmem:[#allocation2 + $0xe08] sm:$0xff]
    %v562 = vld [vmem:[#allocation2 + $0xe10] sm:$0xff]
    %v563 = vld [vmem:[#allocation2 + $0xe18] sm:$0xff]
    %v564 = vld [vmem:[#allocation2 + $0xe20] sm:$0xff]
    %v565 = vld [vmem:[#allocation2 + $0xe28] sm:$0xff]
    %v566 = vld [vmem:[#allocation2 + $0xe30] sm:$0xff]
    %v567 = vld [vmem:[#allocation2 + $0xe38] sm:$0xff]
    %v568 = vld [vmem:[#allocation2 + $0xe40] sm:$0xff]
    %v569 = vld [vmem:[#allocation2 + $0xe48] sm:$0xff]
    %v570 = vld [vmem:[#allocation2 + $0xe50] sm:$0xff]
    %v571 = vld [vmem:[#allocation2 + $0xe58] sm:$0xff]
    %v572 = vld [vmem:[#allocation2 + $0xe60] sm:$0xff]
    %v573 = vld [vmem:[#allocation2 + $0xe68] sm:$0xff]
    %v574 = vld [vmem:[#allocation2 + $0xe70] sm:$0xff]
    %v575 = vld [vmem:[#allocation2 + $0xe78] sm:$0xff]
    %v576 = vld [vmem:[#allocation2 + $0xe80] sm:$0xff]
    %v577 = vld [vmem:[#allocation2 + $0xe88] sm:$0xff]
    %v578 = vld [vmem:[#allocation2 + $0xe90] sm:$0xff]
    %v579 = vld [vmem:[#allocation2 + $0xe98] sm:$0xff]
    %v580 = vld [vmem:[#allocation2 + $0xea0] sm:$0xff]
    %v581 = vld [vmem:[#allocation2 + $0xea8] sm:$0xff]
    %v582 = vld [vmem:[#allocation2 + $0xeb0] sm:$0xff]
    %v583 = vld [vmem:[#allocation2 + $0xeb8] sm:$0xff]
    %v584 = vld [vmem:[#allocation2 + $0xec0] sm:$0xff]
    %v585 = vld [vmem:[#allocation2 + $0xec8] sm:$0xff]
    %v586 = vld [vmem:[#allocation2 + $0xed0] sm:$0xff]
    %v587 = vld [vmem:[#allocation2 + $0xed8] sm:$0xff]
    %v588 = vld [vmem:[#allocation2 + $0xee0] sm:$0xff]
    %v589 = vld [vmem:[#allocation2 + $0xee8] sm:$0xff]
    %v590 = vld [vmem:[#allocation2 + $0xef0] sm:$0xff]
    %v591 = vld [vmem:[#allocation2 + $0xef8] sm:$0xff]
    %v592 = vld [vmem:[#allocation2 + $0xf00] sm:$0xff]
    %v593 = vld [vmem:[#allocation2 + $0xf08] sm:$0xff]
    %v594 = vld [vmem:[#allocation2 + $0xf10] sm:$0xff]
    %v595 = vld [vmem:[#allocation2 + $0xf18] sm:$0xff]
    %v596 = vld [vmem:[#allocation2 + $0xf20] sm:$0xff]
    %v597 = vld [vmem:[#allocation2 + $0xf28] sm:$0xff]
    %v598 = vld [vmem:[#allocation2 + $0xf30] sm:$0xff]
    %v599 = vld [vmem:[#allocation2 + $0xf38] sm:$0xff]
    %v600 = vld [vmem:[#allocation2 + $0xf40] sm:$0xff]
    %v601 = vld [vmem:[#allocation2 + $0xf48] sm:$0xff]
    %v602 = vld [vmem:[#allocation2 + $0xf50] sm:$0xff]
    %v603 = vld [vmem:[#allocation2 + $0xf58] sm:$0xff]
    %v604 = vld [vmem:[#allocation2 + $0xf60] sm:$0xff]
    %v605 = vld [vmem:[#allocation2 + $0xf68] sm:$0xff]
    %v606 = vld [vmem:[#allocation2 + $0xf70] sm:$0xff]
    %v607 = vld [vmem:[#allocation2 + $0xf78] sm:$0xff]
    %v608 = vld [vmem:[#allocation2 + $0xf80] sm:$0xff]
    %v609 = vld [vmem:[#allocation2 + $0xf88] sm:$0xff]
    %v610 = vld [vmem:[#allocation2 + $0xf90] sm:$0xff]
    %v611 = vld [vmem:[#allocation2 + $0xf98] sm:$0xff]
    %v612 = vld [vmem:[#allocation2 + $0xfa0] sm:$0xff]
    %v613 = vld [vmem:[#allocation2 + $0xfa8] sm:$0xff]
    %v614 = vld [vmem:[#allocation2 + $0xfb0] sm:$0xff]
    %v615 = vld [vmem:[#allocation2 + $0xfb8] sm:$0xff]
    %v616 = vld [vmem:[#allocation2 + $0xfc0] sm:$0xff]
    %v617 = vld [vmem:[#allocation2 + $0xfc8] sm:$0xff]
    %v618 = vld [vmem:[#allocation2 + $0xfd0] sm:$0xff]
    %v619 = vld [vmem:[#allocation2 + $0xfd8] sm:$0xff]
    %v620 = vld [vmem:[#allocation2 + $0xfe0] sm:$0xff]
    %v621 = vld [vmem:[#allocation2 + $0xfe8] sm:$0xff]
    %v622 = vld [vmem:[#allocation2 + $0xff0] sm:$0xff]
    %v623 = vld [vmem:[#allocation2 + $0xff8] sm:$0xff]
    %v624 = vld [vmem:[#allocation4] sm:$0xf]
    %v626 = vlaneseq
    %v627 = vshrl.u32 %v626, 7
    %v628 = vsub.s32 0, %v627
    %v629 = vrot.slane %v624, %v628
    %v630 = vlaneseq
    %v631 = vshrl.u32 %v630, 7
    %v632 = vsub.s32 1, %v631
    %v633 = vrot.slane %v624, %v632
    %v634 = vlaneseq
    %v635 = vshrl.u32 %v634, 7
    %v636 = vsub.s32 2, %v635
    %v637 = vrot.slane %v624, %v636
    %v638 = vlaneseq
    %v639 = vshrl.u32 %v638, 7
    %v640 = vsub.s32 3, %v639
    %v641 = vrot.slane %v624, %v640
    %646 = vmatprep.subr.mxu0 %v113
    %647 = vmatpush1.msra.mxu0 %v112
    %648 = vmatprep.subr.mxu0 %v117
    %649 = vmatpush1.msra.mxu0 %v116
    %650 = vmatprep.subr.mxu0 %v121
    %651 = vmatpush1.msra.mxu0 %v120
    %652 = vmatprep.subr.mxu0 %v125
    %653 = vmatpush1.msra.mxu0 %v124
    %654 = vmatprep.subr.mxu0 %v129
    %655 = vmatpush1.msra.mxu0 %v128
    %656 = vmatprep.subr.mxu0 %v133
    %657 = vmatpush1.msra.mxu0 %v132
    %658 = vmatprep.subr.mxu0 %v137
    %659 = vmatpush1.msra.mxu0 %v136
    %660 = vmatprep.subr.mxu0 %v141
    %661 = vmatpush1.msra.mxu0 %v140
    %662 = vmatprep.subr.mxu0 %v145
    %663 = vmatpush1.msra.mxu0 %v144
    %664 = vmatprep.subr.mxu0 %v149
    %665 = vmatpush1.msra.mxu0 %v148
    %666 = vmatprep.subr.mxu0 %v153
    %667 = vmatpush1.msra.mxu0 %v152
    %668 = vmatprep.subr.mxu0 %v157
    %669 = vmatpush1.msra.mxu0 %v156
    %670 = vmatprep.subr.mxu0 %v161
    %671 = vmatpush1.msra.mxu0 %v160
    %672 = vmatprep.subr.mxu0 %v165
    %673 = vmatpush1.msra.mxu0 %v164
    %674 = vmatprep.subr.mxu0 %v169
    %675 = vmatpush1.msra.mxu0 %v168
    %676 = vmatprep.subr.mxu0 %v173
    %677 = vmatpush1.msra.mxu0 %v172
    %678 = vmatprep.subr.mxu0 %v177
    %679 = vmatpush1.msra.mxu0 %v176
    %680 = vmatprep.subr.mxu0 %v181
    %681 = vmatpush1.msra.mxu0 %v180
    %682 = vmatprep.subr.mxu0 %v185
    %683 = vmatpush1.msra.mxu0 %v184
    %684 = vmatprep.subr.mxu0 %v189
    %685 = vmatpush1.msra.mxu0 %v188
    %686 = vmatprep.subr.mxu0 %v193
    %687 = vmatpush1.msra.mxu0 %v192
    %688 = vmatprep.subr.mxu0 %v197
    %689 = vmatpush1.msra.mxu0 %v196
    %690 = vmatprep.subr.mxu0 %v201
    %691 = vmatpush1.msra.mxu0 %v200
    %692 = vmatprep.subr.mxu0 %v205
    %693 = vmatpush1.msra.mxu0 %v204
    %694 = vmatprep.subr.mxu0 %v209
    %695 = vmatpush1.msra.mxu0 %v208
    %696 = vmatprep.subr.mxu0 %v213
    %697 = vmatpush1.msra.mxu0 %v212
    %698 = vmatprep.subr.mxu0 %v217
    %699 = vmatpush1.msra.mxu0 %v216
    %700 = vmatprep.subr.mxu0 %v221
    %701 = vmatpush1.msra.mxu0 %v220
    %702 = vmatprep.subr.mxu0 %v225
    %703 = vmatpush1.msra.mxu0 %v224
    %704 = vmatprep.subr.mxu0 %v229
    %705 = vmatpush1.msra.mxu0 %v228
    %706 = vmatprep.subr.mxu0 %v233
    %707 = vmatpush1.msra.mxu0 %v232
    %708 = vmatprep.subr.mxu0 %v237
    %709 = vmatpush1.msra.mxu0 %v236
    %710 = vmatprep.mubr.f32.mxu0 %v105
    %711 = vmatmul.mubr.f32.gmra.mrb[0].mxu0 %v104
    %v712 = vpop.f32.mrb[0].mxu0
    %v713 = vadd.f32 %v629, %v712
    %v714 = vpop.f32.mrb[0].mxu0
    %v715 = vadd.f32 %v633, %v714
    %716 = vdwg.mxu0
    %717 = vmatprep.subr.mxu0 %v241
    %718 = vmatpush1.msra.mxu0 %v240
    %719 = vmatprep.subr.mxu0 %v245
    %720 = vmatpush1.msra.mxu0 %v244
    %721 = vmatprep.subr.mxu0 %v249
    %722 = vmatpush1.msra.mxu0 %v248
    %723 = vmatprep.subr.mxu0 %v253
    %724 = vmatpush1.msra.mxu0 %v252
    %725 = vmatprep.subr.mxu0 %v257
    %726 = vmatpush1.msra.mxu0 %v256
    %727 = vmatprep.subr.mxu0 %v261
    %728 = vmatpush1.msra.mxu0 %v260
    %729 = vmatprep.subr.mxu0 %v265
    %730 = vmatpush1.msra.mxu0 %v264
    %731 = vmatprep.subr.mxu0 %v269
    %732 = vmatpush1.msra.mxu0 %v268
    %733 = vmatprep.subr.mxu0 %v273
    %734 = vmatpush1.msra.mxu0 %v272
    %735 = vmatprep.subr.mxu0 %v277
    %736 = vmatpush1.msra.mxu0 %v276
    %737 = vmatprep.subr.mxu0 %v281
    %738 = vmatpush1.msra.mxu0 %v280
    %739 = vmatprep.subr.mxu0 %v285
    %740 = vmatpush1.msra.mxu0 %v284
    %741 = vmatprep.subr.mxu0 %v289
    %742 = vmatpush1.msra.mxu0 %v288
    %743 = vmatprep.subr.mxu0 %v293
    %744 = vmatpush1.msra.mxu0 %v292
    %745 = vmatprep.subr.mxu0 %v297
    %746 = vmatpush1.msra.mxu0 %v296
    %747 = vmatprep.subr.mxu0 %v301
    %748 = vmatpush1.msra.mxu0 %v300
    %749 = vmatprep.subr.mxu0 %v305
    %750 = vmatpush1.msra.mxu0 %v304
    %751 = vmatprep.subr.mxu0 %v309
    %752 = vmatpush1.msra.mxu0 %v308
    %753 = vmatprep.subr.mxu0 %v313
    %754 = vmatpush1.msra.mxu0 %v312
    %755 = vmatprep.subr.mxu0 %v317
    %756 = vmatpush1.msra.mxu0 %v316
    %757 = vmatprep.subr.mxu0 %v321
    %758 = vmatpush1.msra.mxu0 %v320
    %759 = vmatprep.subr.mxu0 %v325
    %760 = vmatpush1.msra.mxu0 %v324
    %761 = vmatprep.subr.mxu0 %v329
    %762 = vmatpush1.msra.mxu0 %v328
    %763 = vmatprep.subr.mxu0 %v333
    %764 = vmatpush1.msra.mxu0 %v332
    %765 = vmatprep.subr.mxu0 %v337
    %766 = vmatpush1.msra.mxu0 %v336
    %767 = vmatprep.subr.mxu0 %v341
    %768 = vmatpush1.msra.mxu0 %v340
    %769 = vmatprep.subr.mxu0 %v345
    %770 = vmatpush1.msra.mxu0 %v344
    %771 = vmatprep.subr.mxu0 %v349
    %772 = vmatpush1.msra.mxu0 %v348
    %773 = vmatprep.subr.mxu0 %v353
    %774 = vmatpush1.msra.mxu0 %v352
    %775 = vmatprep.subr.mxu0 %v357
    %776 = vmatpush1.msra.mxu0 %v356
    %777 = vmatprep.subr.mxu0 %v361
    %778 = vmatpush1.msra.mxu0 %v360
    %779 = vmatprep.subr.mxu0 %v365
    %780 = vmatpush1.msra.mxu0 %v364
    %781 = vmatprep.mubr.f32.mxu0 %v107
    %782 = vmatmul.mubr.f32.gmra.mrb[0].mxu0 %v106
    %v783 = vpop.f32.mrb[0].mxu0
    %v784 = vadd.f32 %v713, %v783
    %v785 = vpop.f32.mrb[0].mxu0
    %v786 = vadd.f32 %v715, %v785
    %787 = vdwg.mxu0
    %788 = vmatprep.subr.mxu0 %v369
    %789 = vmatpush1.msra.mxu0 %v368
    %790 = vmatprep.subr.mxu0 %v373
    %791 = vmatpush1.msra.mxu0 %v372
    %792 = vmatprep.subr.mxu0 %v377
    %793 = vmatpush1.msra.mxu0 %v376
    %794 = vmatprep.subr.mxu0 %v381
    %795 = vmatpush1.msra.mxu0 %v380
    %796 = vmatprep.subr.mxu0 %v385
    %797 = vmatpush1.msra.mxu0 %v384
    %798 = vmatprep.subr.mxu0 %v389
    %799 = vmatpush1.msra.mxu0 %v388
    %800 = vmatprep.subr.mxu0 %v393
    %801 = vmatpush1.msra.mxu0 %v392
    %802 = vmatprep.subr.mxu0 %v397
    %803 = vmatpush1.msra.mxu0 %v396
    %804 = vmatprep.subr.mxu0 %v401
    %805 = vmatpush1.msra.mxu0 %v400
    %806 = vmatprep.subr.mxu0 %v405
    %807 = vmatpush1.msra.mxu0 %v404
    %808 = vmatprep.subr.mxu0 %v409
    %809 = vmatpush1.msra.mxu0 %v408
    %810 = vmatprep.subr.mxu0 %v413
    %811 = vmatpush1.msra.mxu0 %v412
    %812 = vmatprep.subr.mxu0 %v417
    %813 = vmatpush1.msra.mxu0 %v416
    %814 = vmatprep.subr.mxu0 %v421
    %815 = vmatpush1.msra.mxu0 %v420
    %816 = vmatprep.subr.mxu0 %v425
    %817 = vmatpush1.msra.mxu0 %v424
    %818 = vmatprep.subr.mxu0 %v429
    %819 = vmatpush1.msra.mxu0 %v428
    %820 = vmatprep.subr.mxu0 %v433
    %821 = vmatpush1.msra.mxu0 %v432
    %822 = vmatprep.subr.mxu0 %v437
    %823 = vmatpush1.msra.mxu0 %v436
    %824 = vmatprep.subr.mxu0 %v441
    %825 = vmatpush1.msra.mxu0 %v440
    %826 = vmatprep.subr.mxu0 %v445
    %827 = vmatpush1.msra.mxu0 %v444
    %828 = vmatprep.subr.mxu0 %v449
    %829 = vmatpush1.msra.mxu0 %v448
    %830 = vmatprep.subr.mxu0 %v453
    %831 = vmatpush1.msra.mxu0 %v452
    %832 = vmatprep.subr.mxu0 %v457
    %833 = vmatpush1.msra.mxu0 %v456
    %834 = vmatprep.subr.mxu0 %v461
    %835 = vmatpush1.msra.mxu0 %v460
    %836 = vmatprep.subr.mxu0 %v465
    %837 = vmatpush1.msra.mxu0 %v464
    %838 = vmatprep.subr.mxu0 %v469
    %839 = vmatpush1.msra.mxu0 %v468
    %840 = vmatprep.subr.mxu0 %v473
    %841 = vmatpush1.msra.mxu0 %v472
    %842 = vmatprep.subr.mxu0 %v477
    %843 = vmatpush1.msra.mxu0 %v476
    %844 = vmatprep.subr.mxu0 %v481
    %845 = vmatpush1.msra.mxu0 %v480
    %846 = vmatprep.subr.mxu0 %v485
    %847 = vmatpush1.msra.mxu0 %v484
    %848 = vmatprep.subr.mxu0 %v489
    %849 = vmatpush1.msra.mxu0 %v488
    %850 = vmatprep.subr.mxu0 %v493
    %851 = vmatpush1.msra.mxu0 %v492
    %852 = vmatprep.mubr.f32.mxu0 %v109
    %853 = vmatmul.mubr.f32.gmra.mrb[0].mxu0 %v108
    %v854 = vpop.f32.mrb[0].mxu0
    %v855 = vadd.f32 %v784, %v854
    %v856 = vpop.f32.mrb[0].mxu0
    %v857 = vadd.f32 %v786, %v856
    %858 = vdwg.mxu0
    %859 = vmatprep.subr.mxu0 %v497
    %860 = vmatpush1.msra.mxu0 %v496
    %861 = vmatprep.subr.mxu0 %v501
    %862 = vmatpush1.msra.mxu0 %v500
    %863 = vmatprep.subr.mxu0 %v505
    %864 = vmatpush1.msra.mxu0 %v504
    %865 = vmatprep.subr.mxu0 %v509
    %866 = vmatpush1.msra.mxu0 %v508
    %867 = vmatprep.subr.mxu0 %v513
    %868 = vmatpush1.msra.mxu0 %v512
    %869 = vmatprep.subr.mxu0 %v517
    %870 = vmatpush1.msra.mxu0 %v516
    %871 = vmatprep.subr.mxu0 %v521
    %872 = vmatpush1.msra.mxu0 %v520
    %873 = vmatprep.subr.mxu0 %v525
    %874 = vmatpush1.msra.mxu0 %v524
    %875 = vmatprep.subr.mxu0 %v529
    %876 = vmatpush1.msra.mxu0 %v528
    %877 = vmatprep.subr.mxu0 %v533
    %878 = vmatpush1.msra.mxu0 %v532
    %879 = vmatprep.subr.mxu0 %v537
    %880 = vmatpush1.msra.mxu0 %v536
    %881 = vmatprep.subr.mxu0 %v541
    %882 = vmatpush1.msra.mxu0 %v540
    %883 = vmatprep.subr.mxu0 %v545
    %884 = vmatpush1.msra.mxu0 %v544
    %885 = vmatprep.subr.mxu0 %v549
    %886 = vmatpush1.msra.mxu0 %v548
    %887 = vmatprep.subr.mxu0 %v553
    %888 = vmatpush1.msra.mxu0 %v552
    %889 = vmatprep.subr.mxu0 %v557
    %890 = vmatpush1.msra.mxu0 %v556
    %891 = vmatprep.subr.mxu0 %v561
    %892 = vmatpush1.msra.mxu0 %v560
    %893 = vmatprep.subr.mxu0 %v565
    %894 = vmatpush1.msra.mxu0 %v564
    %895 = vmatprep.subr.mxu0 %v569
    %896 = vmatpush1.msra.mxu0 %v568
    %897 = vmatprep.subr.mxu0 %v573
    %898 = vmatpush1.msra.mxu0 %v572
    %899 = vmatprep.subr.mxu0 %v577
    %900 = vmatpush1.msra.mxu0 %v576
    %901 = vmatprep.subr.mxu0 %v581
    %902 = vmatpush1.msra.mxu0 %v580
    %903 = vmatprep.subr.mxu0 %v585
    %904 = vmatpush1.msra.mxu0 %v584
    %905 = vmatprep.subr.mxu0 %v589
    %906 = vmatpush1.msra.mxu0 %v588
    %907 = vmatprep.subr.mxu0 %v593
    %908 = vmatpush1.msra.mxu0 %v592
    %909 = vmatprep.subr.mxu0 %v597
    %910 = vmatpush1.msra.mxu0 %v596
    %911 = vmatprep.subr.mxu0 %v601
    %912 = vmatpush1.msra.mxu0 %v600
    %913 = vmatprep.subr.mxu0 %v605
    %914 = vmatpush1.msra.mxu0 %v604
    %915 = vmatprep.subr.mxu0 %v609
    %916 = vmatpush1.msra.mxu0 %v608
    %917 = vmatprep.subr.mxu0 %v613
    %918 = vmatpush1.msra.mxu0 %v612
    %919 = vmatprep.subr.mxu0 %v617
    %920 = vmatpush1.msra.mxu0 %v616
    %921 = vmatprep.subr.mxu0 %v621
    %922 = vmatpush1.msra.mxu0 %v620
    %923 = vmatprep.mubr.f32.mxu0 %v111
    %924 = vmatmul.mubr.f32.gmra.mrb[0].mxu0 %v110
    %v925 = vpop.f32.mrb[0].mxu0
    %v926 = vadd.f32 %v855, %v925
    %v927 = vpop.f32.mrb[0].mxu0
    %v928 = vadd.f32 %v857, %v927
    %929 = vdwg.mxu0
    %930 = vmatprep.subr.mxu0 %v115
    %931 = vmatpush1.msra.mxu0 %v114
    %932 = vmatprep.subr.mxu0 %v119
    %933 = vmatpush1.msra.mxu0 %v118
    %934 = vmatprep.subr.mxu0 %v123
    %935 = vmatpush1.msra.mxu0 %v122
    %936 = vmatprep.subr.mxu0 %v127
    %937 = vmatpush1.msra.mxu0 %v126
    %938 = vmatprep.subr.mxu0 %v131
    %939 = vmatpush1.msra.mxu0 %v130
    %940 = vmatprep.subr.mxu0 %v135
    %941 = vmatpush1.msra.mxu0 %v134
    %942 = vmatprep.subr.mxu0 %v139
    %943 = vmatpush1.msra.mxu0 %v138
    %944 = vmatprep.subr.mxu0 %v143
    %945 = vmatpush1.msra.mxu0 %v142
    %946 = vmatprep.subr.mxu0 %v147
    %947 = vmatpush1.msra.mxu0 %v146
    %948 = vmatprep.subr.mxu0 %v151
    %949 = vmatpush1.msra.mxu0 %v150
    %950 = vmatprep.subr.mxu0 %v155
    %951 = vmatpush1.msra.mxu0 %v154
    %952 = vmatprep.subr.mxu0 %v159
    %953 = vmatpush1.msra.mxu0 %v158
    %954 = vmatprep.subr.mxu0 %v163
    %955 = vmatpush1.msra.mxu0 %v162
    %956 = vmatprep.subr.mxu0 %v167
    %957 = vmatpush1.msra.mxu0 %v166
    %958 = vmatprep.subr.mxu0 %v171
    %959 = vmatpush1.msra.mxu0 %v170
    %960 = vmatprep.subr.mxu0 %v175
    %961 = vmatpush1.msra.mxu0 %v174
    %962 = vmatprep.subr.mxu0 %v179
    %963 = vmatpush1.msra.mxu0 %v178
    %964 = vmatprep.subr.mxu0 %v183
    %965 = vmatpush1.msra.mxu0 %v182
    %966 = vmatprep.subr.mxu0 %v187
    %967 = vmatpush1.msra.mxu0 %v186
    %968 = vmatprep.subr.mxu0 %v191
    %969 = vmatpush1.msra.mxu0 %v190
    %970 = vmatprep.subr.mxu0 %v195
    %971 = vmatpush1.msra.mxu0 %v194
    %972 = vmatprep.subr.mxu0 %v199
    %973 = vmatpush1.msra.mxu0 %v198
    %974 = vmatprep.subr.mxu0 %v203
    %975 = vmatpush1.msra.mxu0 %v202
    %976 = vmatprep.subr.mxu0 %v207
    %977 = vmatpush1.msra.mxu0 %v206
    %978 = vmatprep.subr.mxu0 %v211
    %979 = vmatpush1.msra.mxu0 %v210
    %980 = vmatprep.subr.mxu0 %v215
    %981 = vmatpush1.msra.mxu0 %v214
    %982 = vmatprep.subr.mxu0 %v219
    %983 = vmatpush1.msra.mxu0 %v218
    %984 = vmatprep.subr.mxu0 %v223
    %985 = vmatpush1.msra.mxu0 %v222
    %986 = vmatprep.subr.mxu0 %v227
    %987 = vmatpush1.msra.mxu0 %v226
    %988 = vmatprep.subr.mxu0 %v231
    %989 = vmatpush1.msra.mxu0 %v230
    %990 = vmatprep.subr.mxu0 %v235
    %991 = vmatpush1.msra.mxu0 %v234
    %992 = vmatprep.subr.mxu0 %v239
    %993 = vmatpush1.msra.mxu0 %v238
    %994 = vmatprep.mubr.f32.mxu0 %v105
    %995 = vmatmul.mubr.f32.gmra.mrb[0].mxu0 %v104
    %v996 = vpop.f32.mrb[0].mxu0
    %v997 = vadd.f32 %v637, %v996
    %v998 = vpop.f32.mrb[0].mxu0
    %v999 = vadd.f32 %v641, %v998
    %1000 = vdwg.mxu0
    %1001 = vmatprep.subr.mxu0 %v243
    %1002 = vmatpush1.msra.mxu0 %v242
    %1003 = vmatprep.subr.mxu0 %v247
    %1004 = vmatpush1.msra.mxu0 %v246
    %1005 = vmatprep.subr.mxu0 %v251
    %1006 = vmatpush1.msra.mxu0 %v250
    %1007 = vmatprep.subr.mxu0 %v255
    %1008 = vmatpush1.msra.mxu0 %v254
    %1009 = vmatprep.subr.mxu0 %v259
    %1010 = vmatpush1.msra.mxu0 %v258
    %1011 = vmatprep.subr.mxu0 %v263
    %1012 = vmatpush1.msra.mxu0 %v262
    %1013 = vmatprep.subr.mxu0 %v267
    %1014 = vmatpush1.msra.mxu0 %v266
    %1015 = vmatprep.subr.mxu0 %v271
    %1016 = vmatpush1.msra.mxu0 %v270
    %1017 = vmatprep.subr.mxu0 %v275
    %1018 = vmatpush1.msra.mxu0 %v274
    %1019 = vmatprep.subr.mxu0 %v279
    %1020 = vmatpush1.msra.mxu0 %v278
    %1021 = vmatprep.subr.mxu0 %v283
    %1022 = vmatpush1.msra.mxu0 %v282
    %1023 = vmatprep.subr.mxu0 %v287
    %1024 = vmatpush1.msra.mxu0 %v286
    %1025 = vmatprep.subr.mxu0 %v291
    %1026 = vmatpush1.msra.mxu0 %v290
    %1027 = vmatprep.subr.mxu0 %v295
    %1028 = vmatpush1.msra.mxu0 %v294
    %1029 = vmatprep.subr.mxu0 %v299
    %1030 = vmatpush1.msra.mxu0 %v298
    %1031 = vmatprep.subr.mxu0 %v303
    %1032 = vmatpush1.msra.mxu0 %v302
    %1033 = vmatprep.subr.mxu0 %v307
    %1034 = vmatpush1.msra.mxu0 %v306
    %1035 = vmatprep.subr.mxu0 %v311
    %1036 = vmatpush1.msra.mxu0 %v310
    %1037 = vmatprep.subr.mxu0 %v315
    %1038 = vmatpush1.msra.mxu0 %v314
    %1039 = vmatprep.subr.mxu0 %v319
    %1040 = vmatpush1.msra.mxu0 %v318
    %1041 = vmatprep.subr.mxu0 %v323
    %1042 = vmatpush1.msra.mxu0 %v322
    %1043 = vmatprep.subr.mxu0 %v327
    %1044 = vmatpush1.msra.mxu0 %v326
    %1045 = vmatprep.subr.mxu0 %v331
    %1046 = vmatpush1.msra.mxu0 %v330
    %1047 = vmatprep.subr.mxu0 %v335
    %1048 = vmatpush1.msra.mxu0 %v334
    %1049 = vmatprep.subr.mxu0 %v339
    %1050 = vmatpush1.msra.mxu0 %v338
    %1051 = vmatprep.subr.mxu0 %v343
    %1052 = vmatpush1.msra.mxu0 %v342
    %1053 = vmatprep.subr.mxu0 %v347
    %1054 = vmatpush1.msra.mxu0 %v346
    %1055 = vmatprep.subr.mxu0 %v351
    %1056 = vmatpush1.msra.mxu0 %v350
    %1057 = vmatprep.subr.mxu0 %v355
    %1058 = vmatpush1.msra.mxu0 %v354
    %1059 = vmatprep.subr.mxu0 %v359
    %1060 = vmatpush1.msra.mxu0 %v358
    %1061 = vmatprep.subr.mxu0 %v363
    %1062 = vmatpush1.msra.mxu0 %v362
    %1063 = vmatprep.subr.mxu0 %v367
    %1064 = vmatpush1.msra.mxu0 %v366
    %1065 = vmatprep.mubr.f32.mxu0 %v107
    %1066 = vmatmul.mubr.f32.gmra.mrb[0].mxu0 %v106
    %v1067 = vpop.f32.mrb[0].mxu0
    %v1068 = vadd.f32 %v997, %v1067
    %v1069 = vpop.f32.mrb[0].mxu0
    %v1070 = vadd.f32 %v999, %v1069
    %1071 = vdwg.mxu0
    %1072 = vmatprep.subr.mxu0 %v371
    %1073 = vmatpush1.msra.mxu0 %v370
    %1074 = vmatprep.subr.mxu0 %v375
    %1075 = vmatpush1.msra.mxu0 %v374
    %1076 = vmatprep.subr.mxu0 %v379
    %1077 = vmatpush1.msra.mxu0 %v378
    %1078 = vmatprep.subr.mxu0 %v383
    %1079 = vmatpush1.msra.mxu0 %v382
    %1080 = vmatprep.subr.mxu0 %v387
    %1081 = vmatpush1.msra.mxu0 %v386
    %1082 = vmatprep.subr.mxu0 %v391
    %1083 = vmatpush1.msra.mxu0 %v390
    %1084 = vmatprep.subr.mxu0 %v395
    %1085 = vmatpush1.msra.mxu0 %v394
    %1086 = vmatprep.subr.mxu0 %v399
    %1087 = vmatpush1.msra.mxu0 %v398
    %1088 = vmatprep.subr.mxu0 %v403
    %1089 = vmatpush1.msra.mxu0 %v402
    %1090 = vmatprep.subr.mxu0 %v407
    %1091 = vmatpush1.msra.mxu0 %v406
    %1092 = vmatprep.subr.mxu0 %v411
    %1093 = vmatpush1.msra.mxu0 %v410
    %1094 = vmatprep.subr.mxu0 %v415
    %1095 = vmatpush1.msra.mxu0 %v414
    %1096 = vmatprep.subr.mxu0 %v419
    %1097 = vmatpush1.msra.mxu0 %v418
    %1098 = vmatprep.subr.mxu0 %v423
    %1099 = vmatpush1.msra.mxu0 %v422
    %1100 = vmatprep.subr.mxu0 %v427
    %1101 = vmatpush1.msra.mxu0 %v426
    %1102 = vmatprep.subr.mxu0 %v431
    %1103 = vmatpush1.msra.mxu0 %v430
    %1104 = vmatprep.subr.mxu0 %v435
    %1105 = vmatpush1.msra.mxu0 %v434
    %1106 = vmatprep.subr.mxu0 %v439
    %1107 = vmatpush1.msra.mxu0 %v438
    %1108 = vmatprep.subr.mxu0 %v443
    %1109 = vmatpush1.msra.mxu0 %v442
    %1110 = vmatprep.subr.mxu0 %v447
    %1111 = vmatpush1.msra.mxu0 %v446
    %1112 = vmatprep.subr.mxu0 %v451
    %1113 = vmatpush1.msra.mxu0 %v450
    %1114 = vmatprep.subr.mxu0 %v455
    %1115 = vmatpush1.msra.mxu0 %v454
    %1116 = vmatprep.subr.mxu0 %v459
    %1117 = vmatpush1.msra.mxu0 %v458
    %1118 = vmatprep.subr.mxu0 %v463
    %1119 = vmatpush1.msra.mxu0 %v462
    %1120 = vmatprep.subr.mxu0 %v467
    %1121 = vmatpush1.msra.mxu0 %v466
    %1122 = vmatprep.subr.mxu0 %v471
    %1123 = vmatpush1.msra.mxu0 %v470
    %1124 = vmatprep.subr.mxu0 %v475
    %1125 = vmatpush1.msra.mxu0 %v474
    %1126 = vmatprep.subr.mxu0 %v479
    %1127 = vmatpush1.msra.mxu0 %v478
    %1128 = vmatprep.subr.mxu0 %v483
    %1129 = vmatpush1.msra.mxu0 %v482
    %1130 = vmatprep.subr.mxu0 %v487
    %1131 = vmatpush1.msra.mxu0 %v486
    %1132 = vmatprep.subr.mxu0 %v491
    %1133 = vmatpush1.msra.mxu0 %v490
    %1134 = vmatprep.subr.mxu0 %v495
    %1135 = vmatpush1.msra.mxu0 %v494
    %1136 = vmatprep.mubr.f32.mxu0 %v109
    %1137 = vmatmul.mubr.f32.gmra.mrb[0].mxu0 %v108
    %v1138 = vpop.f32.mrb[0].mxu0
    %v1139 = vadd.f32 %v1068, %v1138
    %v1140 = vpop.f32.mrb[0].mxu0
    %v1141 = vadd.f32 %v1070, %v1140
    %1142 = vdwg.mxu0
    %1143 = vmatprep.subr.mxu0 %v499
    %1144 = vmatpush1.msra.mxu0 %v498
    %1145 = vmatprep.subr.mxu0 %v503
    %1146 = vmatpush1.msra.mxu0 %v502
    %1147 = vmatprep.subr.mxu0 %v507
    %1148 = vmatpush1.msra.mxu0 %v506
    %1149 = vmatprep.subr.mxu0 %v511
    %1150 = vmatpush1.msra.mxu0 %v510
    %1151 = vmatprep.subr.mxu0 %v515
    %1152 = vmatpush1.msra.mxu0 %v514
    %1153 = vmatprep.subr.mxu0 %v519
    %1154 = vmatpush1.msra.mxu0 %v518
    %1155 = vmatprep.subr.mxu0 %v523
    %1156 = vmatpush1.msra.mxu0 %v522
    %1157 = vmatprep.subr.mxu0 %v527
    %1158 = vmatpush1.msra.mxu0 %v526
    %1159 = vmatprep.subr.mxu0 %v531
    %1160 = vmatpush1.msra.mxu0 %v530
    %1161 = vmatprep.subr.mxu0 %v535
    %1162 = vmatpush1.msra.mxu0 %v534
    %1163 = vmatprep.subr.mxu0 %v539
    %1164 = vmatpush1.msra.mxu0 %v538
    %1165 = vmatprep.subr.mxu0 %v543
    %1166 = vmatpush1.msra.mxu0 %v542
    %1167 = vmatprep.subr.mxu0 %v547
    %1168 = vmatpush1.msra.mxu0 %v546
    %1169 = vmatprep.subr.mxu0 %v551
    %1170 = vmatpush1.msra.mxu0 %v550
    %1171 = vmatprep.subr.mxu0 %v555
    %1172 = vmatpush1.msra.mxu0 %v554
    %1173 = vmatprep.subr.mxu0 %v559
    %1174 = vmatpush1.msra.mxu0 %v558
    %1175 = vmatprep.subr.mxu0 %v563
    %1176 = vmatpush1.msra.mxu0 %v562
    %1177 = vmatprep.subr.mxu0 %v567
    %1178 = vmatpush1.msra.mxu0 %v566
    %1179 = vmatprep.subr.mxu0 %v571
    %1180 = vmatpush1.msra.mxu0 %v570
    %1181 = vmatprep.subr.mxu0 %v575
    %1182 = vmatpush1.msra.mxu0 %v574
    %1183 = vmatprep.subr.mxu0 %v579
    %1184 = vmatpush1.msra.mxu0 %v578
    %1185 = vmatprep.subr.mxu0 %v583
    %1186 = vmatpush1.msra.mxu0 %v582
    %1187 = vmatprep.subr.mxu0 %v587
    %1188 = vmatpush1.msra.mxu0 %v586
    %1189 = vmatprep.subr.mxu0 %v591
    %1190 = vmatpush1.msra.mxu0 %v590
    %1191 = vmatprep.subr.mxu0 %v595
    %1192 = vmatpush1.msra.mxu0 %v594
    %1193 = vmatprep.subr.mxu0 %v599
    %1194 = vmatpush1.msra.mxu0 %v598
    %1195 = vmatprep.subr.mxu0 %v603
    %1196 = vmatpush1.msra.mxu0 %v602
    %1197 = vmatprep.subr.mxu0 %v607
    %1198 = vmatpush1.msra.mxu0 %v606
    %1199 = vmatprep.subr.mxu0 %v611
    %1200 = vmatpush1.msra.mxu0 %v610
    %1201 = vmatprep.subr.mxu0 %v615
    %1202 = vmatpush1.msra.mxu0 %v614
    %1203 = vmatprep.subr.mxu0 %v619
    %1204 = vmatpush1.msra.mxu0 %v618
    %1205 = vmatprep.subr.mxu0 %v623
    %1206 = vmatpush1.msra.mxu0 %v622
    %1207 = vmatprep.mubr.f32.mxu0 %v111
    %1208 = vmatmul.mubr.f32.gmra.mrb[0].mxu0 %v110
    %v1209 = vpop.f32.mrb[0].mxu0
    %v1210 = vadd.f32 %v1139, %v1209
    %v1211 = vpop.f32.mrb[0].mxu0
    %v1212 = vadd.f32 %v1141, %v1211
    %1213 = vdwg.mxu0
    %v1214 = vmax.f32 %v926, 0.0
    %v1215 = vmax.f32 %v928, 0.0
    %v1216 = vmax.f32 %v1210, 0.0
    %v1217 = vmax.f32 %v1212, 0.0
    %v1218 = vld [vmem:[#allocation6] sm:$0xff]
    %v1219 = vld [vmem:[#allocation6 + $0x8] sm:$0xff]
    %v1220 = vld [vmem:[#allocation6 + $0x10] sm:$0xff]
    %v1221 = vld [vmem:[#allocation6 + $0x18] sm:$0xff]
    %v1222 = vld [vmem:[#allocation6 + $0x20] sm:$0xff]
    %v1223 = vld [vmem:[#allocation6 + $0x28] sm:$0xff]
    %v1224 = vld [vmem:[#allocation6 + $0x30] sm:$0xff]
    %v1225 = vld [vmem:[#allocation6 + $0x38] sm:$0xff]
    %v1226 = vld [vmem:[#allocation6 + $0x40] sm:$0xff]
    %v1227 = vld [vmem:[#allocation6 + $0x48] sm:$0xff]
    %v1228 = vld [vmem:[#allocation6 + $0x50] sm:$0xff]
    %v1229 = vld [vmem:[#allocation6 + $0x58] sm:$0xff]
    %v1230 = vld [vmem:[#allocation6 + $0x60] sm:$0xff]
    %v1231 = vld [vmem:[#allocation6 + $0x68] sm:$0xff]
    %v1232 = vld [vmem:[#allocation6 + $0x70] sm:$0xff]
    %v1233 = vld [vmem:[#allocation6 + $0x78] sm:$0xff]
    %v1234 = vld [vmem:[#allocation6 + $0x80] sm:$0xff]
    %v1235 = vld [vmem:[#allocation6 + $0x88] sm:$0xff]
    %v1236 = vld [vmem:[#allocation6 + $0x90] sm:$0xff]
    %v1237 = vld [vmem:[#allocation6 + $0x98] sm:$0xff]
    %v1238 = vld [vmem:[#allocation6 + $0xa0] sm:$0xff]
    %v1239 = vld [vmem:[#allocation6 + $0xa8] sm:$0xff]
    %v1240 = vld [vmem:[#allocation6 + $0xb0] sm:$0xff]
    %v1241 = vld [vmem:[#allocation6 + $0xb8] sm:$0xff]
    %v1242 = vld [vmem:[#allocation6 + $0xc0] sm:$0xff]
    %v1243 = vld [vmem:[#allocation6 + $0xc8] sm:$0xff]
    %v1244 = vld [vmem:[#allocation6 + $0xd0] sm:$0xff]
    %v1245 = vld [vmem:[#allocation6 + $0xd8] sm:$0xff]
    %v1246 = vld [vmem:[#allocation6 + $0xe0] sm:$0xff]
    %v1247 = vld [vmem:[#allocation6 + $0xe8] sm:$0xff]
    %v1248 = vld [vmem:[#allocation6 + $0xf0] sm:$0xff]
    %v1249 = vld [vmem:[#allocation6 + $0xf8] sm:$0xff]
    %v1250 = vld [vmem:[#allocation6 + $0x100] sm:$0xff]
    %v1251 = vld [vmem:[#allocation6 + $0x108] sm:$0xff]
    %v1252 = vld [vmem:[#allocation6 + $0x110] sm:$0xff]
    %v1253 = vld [vmem:[#allocation6 + $0x118] sm:$0xff]
    %v1254 = vld [vmem:[#allocation6 + $0x120] sm:$0xff]
    %v1255 = vld [vmem:[#allocation6 + $0x128] sm:$0xff]
    %v1256 = vld [vmem:[#allocation6 + $0x130] sm:$0xff]
    %v1257 = vld [vmem:[#allocation6 + $0x138] sm:$0xff]
    %v1258 = vld [vmem:[#allocation6 + $0x140] sm:$0xff]
    %v1259 = vld [vmem:[#allocation6 + $0x148] sm:$0xff]
    %v1260 = vld [vmem:[#allocation6 + $0x150] sm:$0xff]
    %v1261 = vld [vmem:[#allocation6 + $0x158] sm:$0xff]
    %v1262 = vld [vmem:[#allocation6 + $0x160] sm:$0xff]
    %v1263 = vld [vmem:[#allocation6 + $0x168] sm:$0xff]
    %v1264 = vld [vmem:[#allocation6 + $0x170] sm:$0xff]
    %v1265 = vld [vmem:[#allocation6 + $0x178] sm:$0xff]
    %v1266 = vld [vmem:[#allocation6 + $0x180] sm:$0xff]
    %v1267 = vld [vmem:[#allocation6 + $0x188] sm:$0xff]
    %v1268 = vld [vmem:[#allocation6 + $0x190] sm:$0xff]
    %v1269 = vld [vmem:[#allocation6 + $0x198] sm:$0xff]
    %v1270 = vld [vmem:[#allocation6 + $0x1a0] sm:$0xff]
    %v1271 = vld [vmem:[#allocation6 + $0x1a8] sm:$0xff]
    %v1272 = vld [vmem:[#allocation6 + $0x1b0] sm:$0xff]
    %v1273 = vld [vmem:[#allocation6 + $0x1b8] sm:$0xff]
    %v1274 = vld [vmem:[#allocation6 + $0x1c0] sm:$0xff]
    %v1275 = vld [vmem:[#allocation6 + $0x1c8] sm:$0xff]
    %v1276 = vld [vmem:[#allocation6 + $0x1d0] sm:$0xff]
    %v1277 = vld [vmem:[#allocation6 + $0x1d8] sm:$0xff]
    %v1278 = vld [vmem:[#allocation6 + $0x1e0] sm:$0xff]
    %v1279 = vld [vmem:[#allocation6 + $0x1e8] sm:$0xff]
    %v1280 = vld [vmem:[#allocation6 + $0x1f0] sm:$0xff]
    %v1281 = vld [vmem:[#allocation6 + $0x1f8] sm:$0xff]
    %v1282 = vld [vmem:[#allocation7] sm:$0x1]
    %v1284 = vlaneseq
    %v1285 = vshrl.u32 %v1284, 7
    %v1286 = vsub.s32 0, %v1285
    %v1287 = vrot.slane %v1282, %v1286
    %1289 = vmatprep.subr.mxu0 0.0
    %1290 = vmatpush1.msra.mxu0 %v1218
    %1291 = vmatprep.subr.mxu0 0.0
    %1292 = vmatpush1.msra.mxu0 %v1219
    %1293 = vmatprep.subr.mxu0 0.0
    %1294 = vmatpush1.msra.mxu0 %v1220
    %1295 = vmatprep.subr.mxu0 0.0
    %1296 = vmatpush1.msra.mxu0 %v1221
    %1297 = vmatprep.subr.mxu0 0.0
    %1298 = vmatpush1.msra.mxu0 %v1222
    %1299 = vmatprep.subr.mxu0 0.0
    %1300 = vmatpush1.msra.mxu0 %v1223
    %1301 = vmatprep.subr.mxu0 0.0
    %1302 = vmatpush1.msra.mxu0 %v1224
    %1303 = vmatprep.subr.mxu0 0.0
    %1304 = vmatpush1.msra.mxu0 %v1225
    %1305 = vmatprep.subr.mxu0 0.0
    %1306 = vmatpush1.msra.mxu0 %v1226
    %1307 = vmatprep.subr.mxu0 0.0
    %1308 = vmatpush1.msra.mxu0 %v1227
    %1309 = vmatprep.subr.mxu0 0.0
    %1310 = vmatpush1.msra.mxu0 %v1228
    %1311 = vmatprep.subr.mxu0 0.0
    %1312 = vmatpush1.msra.mxu0 %v1229
    %1313 = vmatprep.subr.mxu0 0.0
    %1314 = vmatpush1.msra.mxu0 %v1230
    %1315 = vmatprep.subr.mxu0 0.0
    %1316 = vmatpush1.msra.mxu0 %v1231
    %1317 = vmatprep.subr.mxu0 0.0
    %1318 = vmatpush1.msra.mxu0 %v1232
    %1319 = vmatprep.subr.mxu0 0.0
    %1320 = vmatpush1.msra.mxu0 %v1233
    %1321 = vmatprep.subr.mxu0 0.0
    %1322 = vmatpush1.msra.mxu0 %v1234
    %1323 = vmatprep.subr.mxu0 0.0
    %1324 = vmatpush1.msra.mxu0 %v1235
    %1325 = vmatprep.subr.mxu0 0.0
    %1326 = vmatpush1.msra.mxu0 %v1236
    %1327 = vmatprep.subr.mxu0 0.0
    %1328 = vmatpush1.msra.mxu0 %v1237
    %1329 = vmatprep.subr.mxu0 0.0
    %1330 = vmatpush1.msra.mxu0 %v1238
    %1331 = vmatprep.subr.mxu0 0.0
    %1332 = vmatpush1.msra.mxu0 %v1239
    %1333 = vmatprep.subr.mxu0 0.0
    %1334 = vmatpush1.msra.mxu0 %v1240
    %1335 = vmatprep.subr.mxu0 0.0
    %1336 = vmatpush1.msra.mxu0 %v1241
    %1337 = vmatprep.subr.mxu0 0.0
    %1338 = vmatpush1.msra.mxu0 %v1242
    %1339 = vmatprep.subr.mxu0 0.0
    %1340 = vmatpush1.msra.mxu0 %v1243
    %1341 = vmatprep.subr.mxu0 0.0
    %1342 = vmatpush1.msra.mxu0 %v1244
    %1343 = vmatprep.subr.mxu0 0.0
    %1344 = vmatpush1.msra.mxu0 %v1245
    %1345 = vmatprep.subr.mxu0 0.0
    %1346 = vmatpush1.msra.mxu0 %v1246
    %1347 = vmatprep.subr.mxu0 0.0
    %1348 = vmatpush1.msra.mxu0 %v1247
    %1349 = vmatprep.subr.mxu0 0.0
    %1350 = vmatpush1.msra.mxu0 %v1248
    %1351 = vmatprep.subr.mxu0 0.0
    %1352 = vmatpush1.msra.mxu0 %v1249
    %1353 = vmatprep.mubr.f32.mxu0 %v1215
    %1354 = vmatmul.mubr.f32.gmra.mrb[0].mxu0 %v1214
    %v1355 = vpop.f32.mrb[0].mxu0
    %v1356 = vadd.f32 %v1287, %v1355
    %v1357 = vpop.f32.mrb[0].mxu0
    %1358 = vdwg.mxu0
    %1359 = vmatprep.subr.mxu0 0.0
    %1360 = vmatpush1.msra.mxu0 %v1250
    %1361 = vmatprep.subr.mxu0 0.0
    %1362 = vmatpush1.msra.mxu0 %v1251
    %1363 = vmatprep.subr.mxu0 0.0
    %1364 = vmatpush1.msra.mxu0 %v1252
    %1365 = vmatprep.subr.mxu0 0.0
    %1366 = vmatpush1.msra.mxu0 %v1253
    %1367 = vmatprep.subr.mxu0 0.0
    %1368 = vmatpush1.msra.mxu0 %v1254
    %1369 = vmatprep.subr.mxu0 0.0
    %1370 = vmatpush1.msra.mxu0 %v1255
    %1371 = vmatprep.subr.mxu0 0.0
    %1372 = vmatpush1.msra.mxu0 %v1256
    %1373 = vmatprep.subr.mxu0 0.0
    %1374 = vmatpush1.msra.mxu0 %v1257
    %1375 = vmatprep.subr.mxu0 0.0
    %1376 = vmatpush1.msra.mxu0 %v1258
    %1377 = vmatprep.subr.mxu0 0.0
    %1378 = vmatpush1.msra.mxu0 %v1259
    %1379 = vmatprep.subr.mxu0 0.0
    %1380 = vmatpush1.msra.mxu0 %v1260
    %1381 = vmatprep.subr.mxu0 0.0
    %1382 = vmatpush1.msra.mxu0 %v1261
    %1383 = vmatprep.subr.mxu0 0.0
    %1384 = vmatpush1.msra.mxu0 %v1262
    %1385 = vmatprep.subr.mxu0 0.0
    %1386 = vmatpush1.msra.mxu0 %v1263
    %1387 = vmatprep.subr.mxu0 0.0
    %1388 = vmatpush1.msra.mxu0 %v1264
    %1389 = vmatprep.subr.mxu0 0.0
    %1390 = vmatpush1.msra.mxu0 %v1265
    %1391 = vmatprep.subr.mxu0 0.0
    %1392 = vmatpush1.msra.mxu0 %v1266
    %1393 = vmatprep.subr.mxu0 0.0
    %1394 = vmatpush1.msra.mxu0 %v1267
    %1395 = vmatprep.subr.mxu0 0.0
    %1396 = vmatpush1.msra.mxu0 %v1268
    %1397 = vmatprep.subr.mxu0 0.0
    %1398 = vmatpush1.msra.mxu0 %v1269
    %1399 = vmatprep.subr.mxu0 0.0
    %1400 = vmatpush1.msra.mxu0 %v1270
    %1401 = vmatprep.subr.mxu0 0.0
    %1402 = vmatpush1.msra.mxu0 %v1271
    %1403 = vmatprep.subr.mxu0 0.0
    %1404 = vmatpush1.msra.mxu0 %v1272
    %1405 = vmatprep.subr.mxu0 0.0
    %1406 = vmatpush1.msra.mxu0 %v1273
    %1407 = vmatprep.subr.mxu0 0.0
    %1408 = vmatpush1.msra.mxu0 %v1274
    %1409 = vmatprep.subr.mxu0 0.0
    %1410 = vmatpush1.msra.mxu0 %v1275
    %1411 = vmatprep.subr.mxu0 0.0
    %1412 = vmatpush1.msra.mxu0 %v1276
    %1413 = vmatprep.subr.mxu0 0.0
    %1414 = vmatpush1.msra.mxu0 %v1277
    %1415 = vmatprep.subr.mxu0 0.0
    %1416 = vmatpush1.msra.mxu0 %v1278
    %1417 = vmatprep.subr.mxu0 0.0
    %1418 = vmatpush1.msra.mxu0 %v1279
    %1419 = vmatprep.subr.mxu0 0.0
    %1420 = vmatpush1.msra.mxu0 %v1280
    %1421 = vmatprep.subr.mxu0 0.0
    %1422 = vmatpush1.msra.mxu0 %v1281
    %1423 = vmatprep.mubr.f32.mxu0 %v1217
    %1424 = vmatmul.mubr.f32.gmra.mrb[0].mxu0 %v1216
    %v1425 = vpop.f32.mrb[0].mxu0
    %v1426 = vadd.f32 %v1356, %v1425
    %v1427 = vpop.f32.mrb[0].mxu0
    %1428 = vdwg.mxu0
    %v1429 = vsub.f32 0.0, %v1426
    %v1430 = vmul.f32 %v1429, 1.442695
    %v1431 = vpow.pop %v1430
    %v1432 = vadd.f32 %v1431, 1.0
    %v1433 = vrcp.pop %v1432
    %v1434 = vmul.f32 1.0, %v1433
    %1435 = vst [vmem:[%s7] sm:$0xff] %v1434
    %v1436 = vld [vmem:[#allocation9] sm:$0xff]
    %v1437 = vld [vmem:[#allocation9 + $0x8] sm:$0xff]
    %v1438 = vld [vmem:[#allocation9 + $0x10] sm:$0xff]
    %v1439 = vld [vmem:[#allocation9 + $0x18] sm:$0xff]
    %v1440 = vld [vmem:[#allocation9 + $0x20] sm:$0xff]
    %v1441 = vld [vmem:[#allocation9 + $0x28] sm:$0xff]
    %v1442 = vld [vmem:[#allocation9 + $0x30] sm:$0xff]
    %v1443 = vld [vmem:[#allocation9 + $0x38] sm:$0xff]
    %v1444 = vld [vmem:[#allocation9 + $0x40] sm:$0xff]
    %v1445 = vld [vmem:[#allocation9 + $0x48] sm:$0xff]
    %v1446 = vld [vmem:[#allocation9 + $0x50] sm:$0xff]
    %v1447 = vld [vmem:[#allocation9 + $0x58] sm:$0xff]
    %v1448 = vld [vmem:[#allocation9 + $0x60] sm:$0xff]
    %v1449 = vld [vmem:[#allocation9 + $0x68] sm:$0xff]
    %v1450 = vld [vmem:[#allocation9 + $0x70] sm:$0xff]
    %v1451 = vld [vmem:[#allocation9 + $0x78] sm:$0xff]
    %v1452 = vld [vmem:[#allocation10] sm:$0x1]
    %v1454 = vlaneseq
    %v1455 = vshrl.u32 %v1454, 7
    %v1456 = vsub.s32 0, %v1455
    %v1457 = vrot.slane %v1452, %v1456
    %1459 = vmatprep.subr.mxu0 0.0
    %1460 = vmatpush1.msra.mxu0 %v1436
    %1461 = vmatprep.subr.mxu0 0.0
    %1462 = vmatpush1.msra.mxu0 %v1437
    %1463 = vmatprep.subr.mxu0 0.0
    %1464 = vmatpush1.msra.mxu0 %v1438
    %1465 = vmatprep.subr.mxu0 0.0
    %1466 = vmatpush1.msra.mxu0 %v1439
    %1467 = vmatprep.subr.mxu0 0.0
    %1468 = vmatpush1.msra.mxu0 %v1440
    %1469 = vmatprep.subr.mxu0 0.0
    %1470 = vmatpush1.msra.mxu0 %v1441
    %1471 = vmatprep.subr.mxu0 0.0
    %1472 = vmatpush1.msra.mxu0 %v1442
    %1473 = vmatprep.subr.mxu0 0.0
    %1474 = vmatpush1.msra.mxu0 %v1443
    %1475 = vmatprep.subr.mxu0 0.0
    %1476 = vmatpush1.msra.mxu0 %v1444
    %1477 = vmatprep.subr.mxu0 0.0
    %1478 = vmatpush1.msra.mxu0 %v1445
    %1479 = vmatprep.subr.mxu0 0.0
    %1480 = vmatpush1.msra.mxu0 %v1446
    %1481 = vmatprep.subr.mxu0 0.0
    %1482 = vmatpush1.msra.mxu0 %v1447
    %1483 = vmatprep.subr.mxu0 0.0
    %1484 = vmatpush1.msra.mxu0 %v1448
    %1485 = vmatprep.subr.mxu0 0.0
    %1486 = vmatpush1.msra.mxu0 %v1449
    %1487 = vmatprep.subr.mxu0 0.0
    %1488 = vmatpush1.msra.mxu0 %v1450
    %1489 = vmatprep.subr.mxu0 0.0
    %1490 = vmatpush1.msra.mxu0 %v1451
    %1491 = vmatprep.subr.mxu0 0.0
    %1492 = vmatpush1.msra.mxu0 0.0
    %1493 = vmatprep.subr.mxu0 0.0
    %1494 = vmatpush1.msra.mxu0 0.0
    %1495 = vmatprep.subr.mxu0 0.0
    %1496 = vmatpush1.msra.mxu0 0.0
    %1497 = vmatprep.subr.mxu0 0.0
    %1498 = vmatpush1.msra.mxu0 0.0
    %1499 = vmatprep.subr.mxu0 0.0
    %1500 = vmatpush1.msra.mxu0 0.0
    %1501 = vmatprep.subr.mxu0 0.0
    %1502 = vmatpush1.msra.mxu0 0.0
    %1503 = vmatprep.subr.mxu0 0.0
    %1504 = vmatpush1.msra.mxu0 0.0
    %1505 = vmatprep.subr.mxu0 0.0
    %1506 = vmatpush1.msra.mxu0 0.0
    %1507 = vmatprep.subr.mxu0 0.0
    %1508 = vmatpush1.msra.mxu0 0.0
    %1509 = vmatprep.subr.mxu0 0.0
    %1510 = vmatpush1.msra.mxu0 0.0
    %1511 = vmatprep.subr.mxu0 0.0
    %1512 = vmatpush1.msra.mxu0 0.0
    %1513 = vmatprep.subr.mxu0 0.0
    %1514 = vmatpush1.msra.mxu0 0.0
    %1515 = vmatprep.subr.mxu0 0.0
    %1516 = vmatpush1.msra.mxu0 0.0
    %1517 = vmatprep.subr.mxu0 0.0
    %1518 = vmatpush1.msra.mxu0 0.0
    %1519 = vmatprep.subr.mxu0 0.0
    %1520 = vmatpush1.msra.mxu0 0.0
    %1521 = vmatprep.subr.mxu0 0.0
    %1522 = vmatpush1.msra.mxu0 0.0
    %1523 = vmatprep.mubr.f32.mxu0 0.0
    %1524 = vmatmul.mubr.f32.gmra.mrb[0].mxu0 %v1434
    %v1525 = vpop.f32.mrb[0].mxu0
    %v1526 = vadd.f32 %v1457, %v1525
    %v1527 = vpop.f32.mrb[0].mxu0
    %1528 = vdwg.mxu0
    %1529 = vst [vmem:[%s8] sm:$0xff] %v1526
    // Predicated region
    $region54: #{two_layer_net_forward.1} parent=1 // pred_check
      _
    $region55: #{two_layer_net_forward.1} parent=1 // pred_check_branch
      %1531 = sbr.rel (0) target = $region57
    $region56: #{two_layer_net_forward.1} parent=1 // pred_region
      _
    $region57: #{two_layer_net_forward.1} parent=1 // pred_fallthru
      _
    // Predicated region
    $region58: #{two_layer_net_forward.1} parent=1 // pred_check
      _
    $region59: #{two_layer_net_forward.1} parent=1 // pred_check_branch
      %1533 = sbr.rel (0) target = $region61
    $region60: #{two_layer_net_forward.1} parent=1 // pred_region
      _
    $region61: #{two_layer_net_forward.1} parent=1 // pred_fallthru
      _
    // Predicated region
    $region62: #{two_layer_net_forward.1} parent=1 // pred_check
      _
    $region63: #{two_layer_net_forward.1} parent=1 // pred_check_branch
      %1535 = sbr.rel (0) target = $region65
    $region64: #{two_layer_net_forward.1} parent=1 // pred_region
      _
    $region65: #{two_layer_net_forward.1} parent=1 // pred_fallthru
      _
    // Predicated region
    $region66: #{two_layer_net_forward.1} parent=1 // pred_check
      _
    $region67: #{two_layer_net_forward.1} parent=1 // pred_check_branch
      %1537 = sbr.rel (0) target = $region69
    $region68: #{two_layer_net_forward.1} parent=1 // pred_region
      _
    $region69: #{two_layer_net_forward.1} parent=1 // pred_fallthru
      _
    %1538 = vsyncpa [#allocation3], 1
    %1539 = vsyncpa [#allocation5], 1
    %1540 = vsyncpa [#allocation8], 1
    %1541 = vsyncpa [#allocation11], 1

</llo_original>
